<compile_context>
chip_gen: v6e
topology: v6e:2x2x1
jax: 0.10.0
libtpu: 0.0.40
codegen_flags: <defaults>
</compile_context>

<pallas_src>
import functools

import jax
import jax.numpy as jnp
from jax import lax
from jax.experimental import pallas as pl
from jax.experimental.pallas import tpu as pltpu


# -----------------------------------------------------------------------------
# helpers
# -----------------------------------------------------------------------------
def _softplus(z):
    # matches torch.nn.functional.softplus (threshold = 20)
    return jnp.where(z > 20.0, z, jnp.log1p(jnp.exp(jnp.minimum(z, 20.0))))


def _round_up(a, b):
    return ((a + b - 1) // b) * b


# -----------------------------------------------------------------------------
# fused kernel: one ensemble x one batch-tile per grid step.
#   all NV source-variable groups are packed block-diagonally into the matmuls;
#   contributions are summed over source variables, NLL + L1 partials are
#   reduced in-kernel, and only two (1, T) rows per (ensemble, tile) go to HBM.
# -----------------------------------------------------------------------------
def _navar_fused_kernel(x_ref, w1_ref, b1_ref, w2_ref, b2_ref, w3_ref, b3_ref,
                        ebias_ref, nll_ref, abs_ref, *,
                        n_var, seq_len, valid_lanes, ksize, dilations, beta):
    NV, S, K = n_var, seq_len, ksize
    d2 = dilations[1]
    T = x_ref.shape[-1]                       # padded lane tile (multiple of 128)

    # hoisted lane-position / validity masks (computed ONCE per grid step)
    lane = lax.broadcasted_iota(jnp.int32, (1, T), 1)
    pos = lane % S                            # position inside its sequence
    in_bounds = lane < valid_lanes            # real (non-padding) lanes

    # ---- layer 1: grouped conv (1 in-channel per group) as K accumulating
    #      block-diagonal matmuls.  The K causal-shifted copies of x (rows
    #      0..K-1 of x_ref) were precomputed lane-dense in the wrapper.
    w1 = w1_ref[0]                            # (K, NV*H, NVP)
    acc = jnp.dot(w1[0], x_ref[0], preferred_element_type=jnp.float32)
    for k in range(1, K):
        acc = acc + jnp.dot(w1[k], x_ref[k], preferred_element_type=jnp.float32)
    h1 = jnp.maximum(acc + b1_ref[0], 0.0)    # (NV*H, T)

    # ---- layer 2: dilated taps as K accumulating block-diagonal matmuls.
    #      Only taps with delay > 0 need an in-kernel causal shift of h1.
    # TODO(synk): swap the concat shift for pltpu.roll(h1, delay, 1) + mask to
    # move the copy onto the idle XLU slot once verified on the target Mosaic.
    def h1_shift(delay):
        if delay == 0:
            return h1
        sh = jnp.concatenate(
            [jnp.zeros((h1.shape[0], delay), h1.dtype), h1[:, :T - delay]],
            axis=1)
        return jnp.where(pos >= delay, sh, 0.0)

    w2 = w2_ref[0]                            # (K, NV*H, NV*H)
    acc = jnp.dot(w2[0], h1_shift((K - 1) * d2),
                  preferred_element_type=jnp.float32)
    for k in range(1, K):
        acc = acc + jnp.dot(w2[k], h1_shift((K - 1 - k) * d2),
                            preferred_element_type=jnp.float32)
    h2 = jnp.maximum(acc + b2_ref[0], 0.0)    # (NV*H, T)

    # ---- layer 3: block-diagonal grouped 1x1 projection.
    #      Row layout (per source variable v): [mean_tgt(NV), raw_var_tgt(NV)].
    out = jnp.dot(w3_ref[0], h2, preferred_element_type=jnp.float32) + b3_ref[0]

    # sum contributions over the NV source variables (+ L1 partial)
    pred = None
    tv = None
    abs_row = None
    for v in range(NV):
        base = v * 2 * NV
        m = out[base:base + NV, :]                       # (NV_tgt, T)
        sp = _softplus(out[base + NV:base + 2 * NV, :])  # (NV_tgt, T)
        pred = m if pred is None else pred + m
        tv = sp if tv is None else tv + sp
        a = jnp.sum(jnp.abs(m), axis=0, keepdims=True)   # (1, T)
        abs_row = a if abs_row is None else abs_row + a

    pred = pred + ebias_ref[0]                # + per-ensemble bias (NV, 1)
    tv = jnp.maximum(tv, 1e-30)               # guard f32 softplus underflow

    # next-step targets x[:, t+1] (precomputed in the wrapper; the last
    # position of each sequence and all padding lanes are masked below)
    x_next = x_ref[K][:NV, :]                 # (NV, T)
    err = (x_next - pred) ** 2
    log_tv = jnp.log(tv)
    nll = 0.5 * (log_tv + err / tv)
    if beta > 0:
        nll = nll * jnp.exp(beta * log_tv)    # == tv ** beta

    loss_mask = jnp.logical_and(pos < S - 1, in_bounds)
    nll = jnp.where(loss_mask, nll, 0.0)
    abs_row = jnp.where(in_bounds, abs_row, 0.0)

    nll_ref[...] = jnp.sum(nll, axis=0, keepdims=True).reshape(1, 1, T)
    abs_ref[...] = abs_row.reshape(1, 1, T)


# -----------------------------------------------------------------------------
# wrapper: pack per-ensemble block-diagonal weights, precompute causal shifts,
# launch the fused kernel, finish the tiny scalar reduction.
# -----------------------------------------------------------------------------
def navar_ua_forward(x, params, n_var, n_ens, hidden, lambda1, beta,
                     ksize=2, dilations=(1, 2), seqs_per_tile=None):
    """Mirrors NAVAR_UA.forward in eval mode (create_artifacts=False, no GT).

    Group ordering convention: g = e * n_var + v (matches torch's
    x.repeat(1, n_ensembles, 1) channel order).
    """
    B, NV, S = x.shape
    assert NV == n_var
    E, H, K = n_ens, hidden, ksize
    G, NVH = E * NV, NV * H
    d1, _ = dilations
    assert params["w1"].shape == (G, H, K) and H == hidden

    # ---- lane tiling: whole sequences per tile, lane-dense (multiple of 128) -
    if seqs_per_tile is None:
        seqs_per_tile = B
    assert B % seqs_per_tile == 0
    BT = B // seqs_per_tile
    raw = seqs_per_tile * S                   # real lanes per tile
    T = _round_up(raw, 128)                   # padded, lane-dense tile
    NVP = _round_up(NV, 8)                    # padded contraction for layer 1

    xf = x.astype(jnp.float32)
    x_nbs = jnp.transpose(xf, (1, 0, 2))      # (NV, B, S)

    def shift_s(v, delay):                    # per-sequence causal zero-padded shift
        if delay == 0:
            return v
        z = jnp.zeros(v.shape[:-1] + (delay,), v.dtype)
        return jnp.concatenate([z, v[..., :S - delay]], axis=-1)

    # rows 0..K-1: layer-1 taps (x shifted by (K-1-k)*d1); row K: x[t+1] targets
    stack = [shift_s(x_nbs, (K - 1 - k) * d1) for k in range(K)]
    x_next = jnp.concatenate(
        [x_nbs[..., 1:], jnp.zeros_like(x_nbs[..., :1])], axis=-1)
    stack.append(x_next)
    xs = jnp.stack(stack, axis=0)             # (K+1, NV, B, S)
    xs = xs.reshape(K + 1, NV, BT, raw)
    xs = jnp.pad(xs, ((0, 0), (0, NVP - NV), (0, 0), (0, T - raw)))
    xs = xs.reshape(K + 1, NVP, BT * T)

    # ---- per-ensemble block-diagonal weight packing (one-time; hoist out of
    #      the step function in a training loop) --------------------------------
    eye = jnp.eye(NV, dtype=jnp.float32)
    w1g = params["w1"].reshape(E, NV, H, K).astype(jnp.float32)
    w2g = params["w2"].reshape(E, NV, H, H, K).astype(jnp.float32)
    w3g = params["w3"].reshape(E, NV, 2 * NV, H).astype(jnp.float32)
    # W1_k[e, v*H+h, u] = w1[e,v,h,k] * delta(v,u)   (contraction padded to NVP)
    w1bd = jnp.einsum("evhk,vu->ekvhu", w1g, eye).reshape(E, K, NVH, NV)
    w1bd = jnp.pad(w1bd, ((0, 0), (0, 0), (0, 0), (0, NVP - NV)))
    # W2_k[e, v*H+i, u*H+j] = w2[e,v,i,j,k] * delta(v,u)
    w2bd = jnp.einsum("evijk,vu->ekviuj", w2g, eye).reshape(E, K, NVH, NVH)
    # W3[e, v*2NV+o, u*H+j] = w3[e,v,o,j] * delta(v,u)
    w3bd = jnp.einsum("evoj,vu->evouj", w3g, eye).reshape(E, 2 * NV * NV, NVH)
    b1p = params["b1"].reshape(E, NVH, 1).astype(jnp.float32)
    b2p = params["b2"].reshape(E, NVH, 1).astype(jnp.float32)
    b3p = params["b3"].reshape(E, 2 * NV * NV, 1).astype(jnp.float32)
    ebias = params["biases"].reshape(E, NV, 1).astype(jnp.float32)

    kern = functools.partial(_navar_fused_kernel, n_var=NV, seq_len=S,
                             valid_lanes=raw, ksize=K, dilations=dilations,
                             beta=beta)

    nll_parts, abs_parts = pl.pallas_call(
        kern,
        out_shape=(jax.ShapeDtypeStruct((E, 1, BT * T), jnp.float32),
                   jax.ShapeDtypeStruct((E, 1, BT * T), jnp.float32)),
        grid=(E, BT),
        in_specs=[
            pl.BlockSpec((K + 1, NVP, T), lambda e, t: (0, 0, t)),      # x stack
            pl.BlockSpec((1, K, NVH, NVP), lambda e, t: (e, 0, 0, 0)),  # W1 taps
            pl.BlockSpec((1, NVH, 1), lambda e, t: (e, 0, 0)),          # b1
            pl.BlockSpec((1, K, NVH, NVH), lambda e, t: (e, 0, 0, 0)),  # W2 taps
            pl.BlockSpec((1, NVH, 1), lambda e, t: (e, 0, 0)),          # b2
            pl.BlockSpec((1, 2 * NV * NV, NVH), lambda e, t: (e, 0, 0)),  # W3
            pl.BlockSpec((1, 2 * NV * NV, 1), lambda e, t: (e, 0, 0)),  # b3
            pl.BlockSpec((1, NV, 1), lambda e, t: (e, 0, 0)),           # ens. bias
        ],
        out_specs=(pl.BlockSpec((1, 1, T), lambda e, t: (e, 0, t)),
                   pl.BlockSpec((1, 1, T), lambda e, t: (e, 0, t))),
        compiler_params=pltpu.CompilerParams(
            dimension_semantics=("parallel", "parallel")),
    )(xs, w1bd, b1p, w2bd, b2p, w3bd, b3p, ebias)

    nll_loss = jnp.sum(nll_parts) / float(B * E * NV * (S - 1))
    reg_loss = lambda1 * jnp.sum(abs_parts) / float(B * E * NV * NV * S)
    metrics = {"loss": nll_loss + reg_loss}
    artifacts = {}
    return metrics, artifacts


# -----------------------------------------------------------------------------
# parameter init (deterministic, synthetic); g = e*n_var + v ordering
# -----------------------------------------------------------------------------
def init_params(key, n_var, n_ens, hidden, ksize=2):
    G = n_var * n_ens
    H = hidden
    ks = jax.random.split(key, 7)
    scale = 1.0 / jnp.sqrt(jnp.float32(H))
    return {
        "w1": 0.3 * jax.random.normal(ks[0], (G, H, ksize), jnp.float32),
        "b1": 0.1 * jax.random.normal(ks[1], (G, H, 1), jnp.float32),
        "w2": scale * jax.random.normal(ks[2], (G, H, H, ksize), jnp.float32),
        "b2": 0.1 * jax.random.normal(ks[3], (G, H, 1), jnp.float32),
        "w3": scale * jax.random.normal(ks[4], (G, 2 * n_var, H), jnp.float32),
        "b3": 0.1 * jax.random.normal(ks[5], (G, 2 * n_var, 1), jnp.float32),
        # nn.Parameter(torch.randn(1, n_ensembles, n_variables, 1) * 0.01)
        "biases": 0.01 * jax.random.normal(ks[6], (1, n_ens, n_var, 1), jnp.float32),
    }


# -----------------------------------------------------------------------------
# pure-JAX reference (for correctness check only)
# -----------------------------------------------------------------------------
def _ref_loss(x, p, n_var, n_ens, lambda1, beta, ksize=2, dilations=(1, 2)):
    B, NV, S = x.shape
    G = n_var * n_ens
    d1, d2 = dilations
    x_rep = jnp.tile(x, (1, n_ens, 1))  # (B, G, S)

    def shift(v, n):
        if n == 0:
            return v
        z = jnp.zeros(v.shape[:-1] + (n,), v.dtype)
        return jnp.concatenate([z, v[..., : v.shape[-1] - n]], axis=-1)

    outs = []
    for g in range(G):
        xg = x_rep[:, g][:, None, :]                               # (B, 1, S)
        acc1 = 0.0
        for k in range(ksize):
            acc1 = acc1 + p["w1"][g][:, k][None, :, None] * shift(xg, (ksize - 1 - k) * d1)
        h1 = jax.nn.relu(acc1 + p["b1"][g][None])                  # (B, H, S)
        acc2 = 0.0
        for k in range(ksize):
            acc2 = acc2 + jnp.einsum("oi,bis->bos", p["w2"][g][:, :, k],
                                     shift(h1, (ksize - 1 - k) * d2))
        h2 = jax.nn.relu(acc2 + p["b2"][g][None])
        out = jnp.einsum("oi,bis->bos", p["w3"][g], h2) + p["b3"][g][None]
        outs.append(out)                                           # (B, 2NV, S)
    out = jnp.stack(outs, axis=1)                                  # (B, G, 2NV, S)

    mean5 = out[:, :, :NV].reshape(B, n_ens, NV, NV, S)
    var5 = _softplus(out[:, :, NV:]).reshape(B, n_ens, NV, NV, S)
    pred = mean5.sum(axis=2) + p["biases"]                         # (B, E, NV, S)
    err = (x[:, None, :, 1:] - pred[..., :-1]) ** 2
    tv = var5[..., :-1].sum(axis=2)
    nll = 0.5 * (jnp.log(tv) + err / tv)
    if beta > 0:
        nll = nll * tv ** beta
    return jnp.mean(nll) + lambda1 * jnp.mean(jnp.abs(mean5))


# -----------------------------------------------------------------------------
if __name__ == "__main__":
    n_var, n_ens, hidden = 3, 2, 32
    B, S = 2, 16
    lambda1, beta = 0.1, 0.5

    key = jax.random.PRNGKey(0)
    kx, kp = jax.random.split(key)
    x = jax.random.normal(kx, (B, n_var, S), jnp.float32)
    params = init_params(kp, n_var, n_ens, hidden)

    metrics, artifacts = navar_ua_forward(x, params, n_var, n_ens, hidden,
                                          lambda1, beta)
    loss = jax.block_until_ready(metrics["loss"])

    ref = _ref_loss(x, params, n_var, n_ens, lambda1, beta)
    assert jnp.isfinite(loss)
    # residual mismatch is matmul-precision / summation-order reassociation only
    assert jnp.allclose(loss, ref, rtol=2e-2, atol=2e-2), (loss, ref)
    print("KERNEL_OK")
</pallas_src>

<mosaic_0001>
module attributes {stable_mosaic.version = 11 : i64} {
  func.func @_navar_fused_kernel(%arg0: i32, %arg1: i32, %arg2: memref<3x8x128xf32, #tpu.memory_space<vmem>>, %arg3: memref<1x2x96x8xf32, #tpu.memory_space<vmem>>, %arg4: memref<1x96x1xf32, #tpu.memory_space<vmem>>, %arg5: memref<1x2x96x96xf32, #tpu.memory_space<vmem>>, %arg6: memref<1x96x1xf32, #tpu.memory_space<vmem>>, %arg7: memref<1x18x96xf32, #tpu.memory_space<vmem>>, %arg8: memref<1x18x1xf32, #tpu.memory_space<vmem>>, %arg9: memref<1x3x1xf32, #tpu.memory_space<vmem>>, %arg10: memref<1x1x128xf32, #tpu.memory_space<vmem>>, %arg11: memref<1x1x128xf32, #tpu.memory_space<vmem>>) attributes {dimension_semantics = [#tpu.dimension_semantics<parallel>, #tpu.dimension_semantics<parallel>], iteration_bounds = array<i64: 2, 1>, scalar_prefetch = 0 : i64, scratch_operands = 0 : i64, tpu.core_type = #tpu.core_type<tc>, window_params = [{transform_indices = @transform_0, window_bounds = array<i64: 3, 8, 128>}, {transform_indices = @transform_1, window_bounds = array<i64: 1, 2, 96, 8>}, {transform_indices = @transform_2, window_bounds = array<i64: 1, 96, 1>}, {transform_indices = @transform_3, window_bounds = array<i64: 1, 2, 96, 96>}, {transform_indices = @transform_4, window_bounds = array<i64: 1, 96, 1>}, {transform_indices = @transform_5, window_bounds = array<i64: 1, 18, 96>}, {transform_indices = @transform_6, window_bounds = array<i64: 1, 18, 1>}, {transform_indices = @transform_7, window_bounds = array<i64: 1, 3, 1>}, {transform_indices = @transform_8, window_bounds = array<i64: 1, 1, 128>}, {transform_indices = @transform_9, window_bounds = array<i64: 1, 1, 128>}]} {
    %0 = tpu.iota {dimensions = array<i32: 1>} : vector<1x128xi32>
    %c16_i32 = arith.constant 16 : i32
    %c0_i32 = arith.constant 0 : i32
    %1 = arith.cmpi eq, %c16_i32, %c0_i32 : i32
    %c1_i32 = arith.constant 1 : i32
    %2 = arith.select %1, %c1_i32, %c16_i32 : i32
    %3 = vector.broadcast %2 : i32 to vector<1x128xi32>
    %4 = arith.remsi %0, %3 : vector<1x128xi32>
    %c0_i32_0 = arith.constant 0 : i32
    %5 = vector.broadcast %c0_i32_0 : i32 to vector<1x128xi32>
    %6 = arith.cmpi ne, %4, %5 : vector<1x128xi32>
    %c0_i32_1 = arith.constant 0 : i32
    %7 = vector.broadcast %c0_i32_1 : i32 to vector<1x128xi32>
    %8 = arith.cmpi slt, %4, %7 : vector<1x128xi32>
    %c0_i32_2 = arith.constant 0 : i32
    %9 = arith.cmpi slt, %2, %c0_i32_2 : i32
    %10 = vector.broadcast %9 : i1 to vector<1x128xi1>
    %11 = vector.broadcast %10 : vector<1x128xi1> to vector<1x128xi1>
    %12 = arith.xori %8, %11 : vector<1x128xi1>
    %13 = arith.andi %12, %6 : vector<1x128xi1>
    %14 = vector.broadcast %2 : i32 to vector<1x128xi32>
    %15 = arith.addi %4, %14 : vector<1x128xi32>
    %16 = arith.select %13, %15, %4 : vector<1x128xi1>, vector<1x128xi32>
    %c32_i32 = arith.constant 32 : i32
    %17 = vector.broadcast %c32_i32 : i32 to vector<1x128xi32>
    %18 = arith.cmpi slt, %0, %17 : vector<1x128xi32>
    %c0 = arith.constant 0 : index
    %c0_3 = arith.constant 0 : index
    %c0_4 = arith.constant 0 : index
    %c0_5 = arith.constant 0 : index
    %19 = vector.load %arg3[%c0, %c0_3, %c0_4, %c0_5] : memref<1x2x96x8xf32, #tpu.memory_space<vmem>>, vector<1x2x96x8xf32>
    %20 = vector.shape_cast %19 : vector<1x2x96x8xf32> to vector<2x96x8xf32>
    %21 = vector.extract_strided_slice %20 {offsets = [0, 0, 0], sizes = [1, 96, 8], strides = [1, 1, 1]} : vector<2x96x8xf32> to vector<1x96x8xf32>
    %22 = vector.shape_cast %21 : vector<1x96x8xf32> to vector<96x8xf32>
    %c0_6 = arith.constant 0 : index
    %c0_7 = arith.constant 0 : index
    %c0_8 = arith.constant 0 : index
    %23 = vector.load %arg2[%c0_6, %c0_7, %c0_8] : memref<3x8x128xf32, #tpu.memory_space<vmem>>, vector<1x8x128xf32>
    %24 = vector.shape_cast %23 : vector<1x8x128xf32> to vector<8x128xf32>
    %cst = arith.constant dense<0.000000e+00> : vector<96x128xf32>
    %25 = tpu.matmul %22, %24, %cst {dimension_numbers = #tpu.dot_dimension_numbers<[1], [0], [0], [1], [0, 0, 1, 1], [], []>} : vector<96x8xf32>, vector<8x128xf32>, vector<96x128xf32> -> vector<96x128xf32>
    %26 = vector.extract_strided_slice %20 {offsets = [1, 0, 0], sizes = [1, 96, 8], strides = [1, 1, 1]} : vector<2x96x8xf32> to vector<1x96x8xf32>
    %27 = vector.shape_cast %26 : vector<1x96x8xf32> to vector<96x8xf32>
    %c1 = arith.constant 1 : index
    %c0_9 = arith.constant 0 : index
    %c0_10 = arith.constant 0 : index
    %28 = vector.load %arg2[%c1, %c0_9, %c0_10] : memref<3x8x128xf32, #tpu.memory_space<vmem>>, vector<1x8x128xf32>
    %29 = vector.shape_cast %28 : vector<1x8x128xf32> to vector<8x128xf32>
    %cst_11 = arith.constant dense<0.000000e+00> : vector<96x128xf32>
    %30 = tpu.matmul %27, %29, %cst_11 {dimension_numbers = #tpu.dot_dimension_numbers<[1], [0], [0], [1], [0, 0, 1, 1], [], []>} : vector<96x8xf32>, vector<8x128xf32>, vector<96x128xf32> -> vector<96x128xf32>
    %31 = arith.addf %25, %30 : vector<96x128xf32>
    %c0_12 = arith.constant 0 : index
    %c0_13 = arith.constant 0 : index
    %c0_14 = arith.constant 0 : index
    %32 = vector.load %arg4[%c0_12, %c0_13, %c0_14] : memref<1x96x1xf32, #tpu.memory_space<vmem>>, vector<1x96x1xf32>
    %33 = vector.shape_cast %32 : vector<1x96x1xf32> to vector<96x1xf32>
    %34 = vector.broadcast %33 : vector<96x1xf32> to vector<96x128xf32>
    %35 = arith.addf %31, %34 : vector<96x128xf32>
    %cst_15 = arith.constant 0.000000e+00 : f32
    %36 = vector.broadcast %cst_15 : f32 to vector<96x128xf32>
    %37 = arith.maximumf %35, %36 : vector<96x128xf32>
    %c0_16 = arith.constant 0 : index
    %c0_17 = arith.constant 0 : index
    %c0_18 = arith.constant 0 : index
    %c0_19 = arith.constant 0 : index
    %38 = vector.load %arg5[%c0_16, %c0_17, %c0_18, %c0_19] : memref<1x2x96x96xf32, #tpu.memory_space<vmem>>, vector<1x2x96x96xf32>
    %39 = vector.shape_cast %38 : vector<1x2x96x96xf32> to vector<2x96x96xf32>
    %40 = vector.extract_strided_slice %39 {offsets = [0, 0, 0], sizes = [1, 96, 96], strides = [1, 1, 1]} : vector<2x96x96xf32> to vector<1x96x96xf32>
    %41 = vector.shape_cast %40 : vector<1x96x96xf32> to vector<96x96xf32>
    %cst_20 = arith.constant 0.000000e+00 : f32
    %42 = vector.broadcast %cst_20 : f32 to vector<96x2xf32>
    %43 = vector.extract_strided_slice %37 {offsets = [0, 0], sizes = [96, 126], strides = [1, 1]} : vector<96x128xf32> to vector<96x126xf32>
    %44 = tpu.concatenate %42, %43 in 1 : vector<96x2xf32>, vector<96x126xf32> -> vector<96x128xf32>
    %c2_i32 = arith.constant 2 : i32
    %45 = vector.broadcast %c2_i32 : i32 to vector<1x128xi32>
    %46 = arith.cmpi sge, %16, %45 : vector<1x128xi32>
    %cst_21 = arith.constant 0.000000e+00 : f32
    %47 = vector.shape_cast %46 : vector<1x128xi1> to vector<1x128xi1>
    %48 = vector.broadcast %47 : vector<1x128xi1> to vector<96x128xi1>
    %49 = vector.broadcast %cst_21 : f32 to vector<96x128xf32>
    %50 = arith.select %48, %44, %49 : vector<96x128xi1>, vector<96x128xf32>
    %cst_22 = arith.constant dense<0.000000e+00> : vector<96x128xf32>
    %51 = tpu.matmul %41, %50, %cst_22 {dimension_numbers = #tpu.dot_dimension_numbers<[1], [0], [0], [1], [0, 0, 1, 1], [], []>} : vector<96x96xf32>, vector<96x128xf32>, vector<96x128xf32> -> vector<96x128xf32>
    %52 = vector.extract_strided_slice %39 {offsets = [1, 0, 0], sizes = [1, 96, 96], strides = [1, 1, 1]} : vector<2x96x96xf32> to vector<1x96x96xf32>
    %53 = vector.shape_cast %52 : vector<1x96x96xf32> to vector<96x96xf32>
    %cst_23 = arith.constant dense<0.000000e+00> : vector<96x128xf32>
    %54 = tpu.matmul %53, %37, %cst_23 {dimension_numbers = #tpu.dot_dimension_numbers<[1], [0], [0], [1], [0, 0, 1, 1], [], []>} : vector<96x96xf32>, vector<96x128xf32>, vector<96x128xf32> -> vector<96x128xf32>
    %55 = arith.addf %51, %54 : vector<96x128xf32>
    %c0_24 = arith.constant 0 : index
    %c0_25 = arith.constant 0 : index
    %c0_26 = arith.constant 0 : index
    %56 = vector.load %arg6[%c0_24, %c0_25, %c0_26] : memref<1x96x1xf32, #tpu.memory_space<vmem>>, vector<1x96x1xf32>
    %57 = vector.shape_cast %56 : vector<1x96x1xf32> to vector<96x1xf32>
    %58 = vector.broadcast %57 : vector<96x1xf32> to vector<96x128xf32>
    %59 = arith.addf %55, %58 : vector<96x128xf32>
    %cst_27 = arith.constant 0.000000e+00 : f32
    %60 = vector.broadcast %cst_27 : f32 to vector<96x128xf32>
    %61 = arith.maximumf %59, %60 : vector<96x128xf32>
    %c0_28 = arith.constant 0 : index
    %c0_29 = arith.constant 0 : index
    %c0_30 = arith.constant 0 : index
    %62 = vector.load %arg7[%c0_28, %c0_29, %c0_30] : memref<1x18x96xf32, #tpu.memory_space<vmem>>, vector<1x18x96xf32>
    %63 = vector.shape_cast %62 : vector<1x18x96xf32> to vector<18x96xf32>
    %cst_31 = arith.constant dense<0.000000e+00> : vector<18x128xf32>
    %64 = tpu.matmul %63, %61, %cst_31 {dimension_numbers = #tpu.dot_dimension_numbers<[1], [0], [0], [1], [0, 0, 1, 1], [], []>} : vector<18x96xf32>, vector<96x128xf32>, vector<18x128xf32> -> vector<18x128xf32>
    %c0_32 = arith.constant 0 : index
    %c0_33 = arith.constant 0 : index
    %c0_34 = arith.constant 0 : index
    %65 = vector.load %arg8[%c0_32, %c0_33, %c0_34] : memref<1x18x1xf32, #tpu.memory_space<vmem>>, vector<1x18x1xf32>
    %66 = vector.shape_cast %65 : vector<1x18x1xf32> to vector<18x1xf32>
    %67 = vector.broadcast %66 : vector<18x1xf32> to vector<18x128xf32>
    %68 = arith.addf %64, %67 : vector<18x128xf32>
    %69 = vector.extract_strided_slice %68 {offsets = [0, 0], sizes = [3, 128], strides = [1, 1]} : vector<18x128xf32> to vector<3x128xf32>
    %70 = vector.extract_strided_slice %68 {offsets = [3, 0], sizes = [3, 128], strides = [1, 1]} : vector<18x128xf32> to vector<3x128xf32>
    %cst_35 = arith.constant 2.000000e+01 : f32
    %71 = vector.broadcast %cst_35 : f32 to vector<3x128xf32>
    %72 = arith.cmpf ogt, %70, %71 : vector<3x128xf32>
    %cst_36 = arith.constant 2.000000e+01 : f32
    %73 = vector.broadcast %cst_36 : f32 to vector<3x128xf32>
    %74 = arith.minimumf %70, %73 : vector<3x128xf32>
    %75 = math.exp %74 : vector<3x128xf32>
    %76 = math.log1p %75 : vector<3x128xf32>
    %77 = arith.select %72, %70, %76 : vector<3x128xi1>, vector<3x128xf32>
    %78 = math.absf %69 : vector<3x128xf32>
    %cst_37 = arith.constant dense<0.000000e+00> : vector<128xf32>
    %79 = vector.multi_reduction <add>, %78, %cst_37 [0] : vector<3x128xf32> to vector<128xf32>
    %80 = vector.shape_cast %79 : vector<128xf32> to vector<1x128xf32>
    %81 = vector.extract_strided_slice %68 {offsets = [6, 0], sizes = [3, 128], strides = [1, 1]} : vector<18x128xf32> to vector<3x128xf32>
    %82 = vector.extract_strided_slice %68 {offsets = [9, 0], sizes = [3, 128], strides = [1, 1]} : vector<18x128xf32> to vector<3x128xf32>
    %cst_38 = arith.constant 2.000000e+01 : f32
    %83 = vector.broadcast %cst_38 : f32 to vector<3x128xf32>
    %84 = arith.cmpf ogt, %82, %83 : vector<3x128xf32>
    %cst_39 = arith.constant 2.000000e+01 : f32
    %85 = vector.broadcast %cst_39 : f32 to vector<3x128xf32>
    %86 = arith.minimumf %82, %85 : vector<3x128xf32>
    %87 = math.exp %86 : vector<3x128xf32>
    %88 = math.log1p %87 : vector<3x128xf32>
    %89 = arith.select %84, %82, %88 : vector<3x128xi1>, vector<3x128xf32>
    %90 = arith.addf %69, %81 : vector<3x128xf32>
    %91 = arith.addf %77, %89 : vector<3x128xf32>
    %92 = math.absf %81 : vector<3x128xf32>
    %cst_40 = arith.constant dense<0.000000e+00> : vector<128xf32>
    %93 = vector.multi_reduction <add>, %92, %cst_40 [0] : vector<3x128xf32> to vector<128xf32>
    %94 = vector.shape_cast %93 : vector<128xf32> to vector<1x128xf32>
    %95 = arith.addf %80, %94 : vector<1x128xf32>
    %96 = vector.extract_strided_slice %68 {offsets = [12, 0], sizes = [3, 128], strides = [1, 1]} : vector<18x128xf32> to vector<3x128xf32>
    %97 = vector.extract_strided_slice %68 {offsets = [15, 0], sizes = [3, 128], strides = [1, 1]} : vector<18x128xf32> to vector<3x128xf32>
    %cst_41 = arith.constant 2.000000e+01 : f32
    %98 = vector.broadcast %cst_41 : f32 to vector<3x128xf32>
    %99 = arith.cmpf ogt, %97, %98 : vector<3x128xf32>
    %cst_42 = arith.constant 2.000000e+01 : f32
    %100 = vector.broadcast %cst_42 : f32 to vector<3x128xf32>
    %101 = arith.minimumf %97, %100 : vector<3x128xf32>
    %102 = math.exp %101 : vector<3x128xf32>
    %103 = math.log1p %102 : vector<3x128xf32>
    %104 = arith.select %99, %97, %103 : vector<3x128xi1>, vector<3x128xf32>
    %105 = arith.addf %90, %96 : vector<3x128xf32>
    %106 = arith.addf %91, %104 : vector<3x128xf32>
    %107 = math.absf %96 : vector<3x128xf32>
    %cst_43 = arith.constant dense<0.000000e+00> : vector<128xf32>
    %108 = vector.multi_reduction <add>, %107, %cst_43 [0] : vector<3x128xf32> to vector<128xf32>
    %109 = vector.shape_cast %108 : vector<128xf32> to vector<1x128xf32>
    %110 = arith.addf %95, %109 : vector<1x128xf32>
    %c0_44 = arith.constant 0 : index
    %c0_45 = arith.constant 0 : index
    %c0_46 = arith.constant 0 : index
    %111 = vector.load %arg9[%c0_44, %c0_45, %c0_46] : memref<1x3x1xf32, #tpu.memory_space<vmem>>, vector<1x3x1xf32>
    %112 = vector.shape_cast %111 : vector<1x3x1xf32> to vector<3x1xf32>
    %113 = vector.broadcast %112 : vector<3x1xf32> to vector<3x128xf32>
    %114 = arith.addf %105, %113 : vector<3x128xf32>
    %cst_47 = arith.constant 1.000000e-30 : f32
    %115 = vector.broadcast %cst_47 : f32 to vector<3x128xf32>
    %116 = arith.maximumf %106, %115 : vector<3x128xf32>
    %c2 = arith.constant 2 : index
    %c0_48 = arith.constant 0 : index
    %c0_49 = arith.constant 0 : index
    %117 = vector.load %arg2[%c2, %c0_48, %c0_49] : memref<3x8x128xf32, #tpu.memory_space<vmem>>, vector<1x8x128xf32>
    %118 = vector.shape_cast %117 : vector<1x8x128xf32> to vector<8x128xf32>
    %119 = vector.extract_strided_slice %118 {offsets = [0, 0], sizes = [3, 128], strides = [1, 1]} : vector<8x128xf32> to vector<3x128xf32>
    %120 = arith.subf %119, %114 : vector<3x128xf32>
    %121 = arith.mulf %120, %120 : vector<3x128xf32>
    %122 = math.log %116 : vector<3x128xf32>
    %123 = arith.divf %121, %116 : vector<3x128xf32>
    %124 = arith.addf %122, %123 : vector<3x128xf32>
    %cst_50 = arith.constant 5.000000e-01 : f32
    %125 = vector.broadcast %cst_50 : f32 to vector<3x128xf32>
    %126 = arith.mulf %125, %124 : vector<3x128xf32>
    %cst_51 = arith.constant 5.000000e-01 : f32
    %127 = vector.broadcast %cst_51 : f32 to vector<3x128xf32>
    %128 = arith.mulf %127, %122 : vector<3x128xf32>
    %129 = math.exp %128 : vector<3x128xf32>
    %130 = arith.mulf %126, %129 : vector<3x128xf32>
    %c15_i32 = arith.constant 15 : i32
    %131 = vector.broadcast %c15_i32 : i32 to vector<1x128xi32>
    %132 = arith.cmpi slt, %16, %131 : vector<1x128xi32>
    %133 = arith.andi %132, %18 : vector<1x128xi1>
    %cst_52 = arith.constant 0.000000e+00 : f32
    %134 = vector.shape_cast %133 : vector<1x128xi1> to vector<1x128xi1>
    %135 = vector.broadcast %134 : vector<1x128xi1> to vector<3x128xi1>
    %136 = vector.broadcast %cst_52 : f32 to vector<3x128xf32>
    %137 = arith.select %135, %130, %136 : vector<3x128xi1>, vector<3x128xf32>
    %cst_53 = arith.constant 0.000000e+00 : f32
    %138 = vector.broadcast %cst_53 : f32 to vector<1x128xf32>
    %139 = arith.select %18, %110, %138 : vector<1x128xi1>, vector<1x128xf32>
    %cst_54 = arith.constant dense<0.000000e+00> : vector<128xf32>
    %140 = vector.multi_reduction <add>, %137, %cst_54 [0] : vector<3x128xf32> to vector<128xf32>
    %141 = vector.shape_cast %140 : vector<128xf32> to vector<1x128xf32>
    %142 = vector.shape_cast %141 : vector<1x128xf32> to vector<1x1x128xf32>
    %c0_55 = arith.constant 0 : index
    %c0_56 = arith.constant 0 : index
    %c0_57 = arith.constant 0 : index
    %143 = vector.load %arg10[%c0_55, %c0_56, %c0_57] : memref<1x1x128xf32, #tpu.memory_space<vmem>>, vector<1x1x128xf32>
    tpu.vector_store %arg10[%c0_55, %c0_56, %c0_57], %142 {strides = array<i32>} : memref<1x1x128xf32, #tpu.memory_space<vmem>>, vector<1x1x128xf32>,
    %144 = vector.shape_cast %139 : vector<1x128xf32> to vector<1x1x128xf32>
    %c0_58 = arith.constant 0 : index
    %c0_59 = arith.constant 0 : index
    %c0_60 = arith.constant 0 : index
    %145 = vector.load %arg11[%c0_58, %c0_59, %c0_60] : memref<1x1x128xf32, #tpu.memory_space<vmem>>, vector<1x1x128xf32>
    tpu.vector_store %arg11[%c0_58, %c0_59, %c0_60], %144 {strides = array<i32>} : memref<1x1x128xf32, #tpu.memory_space<vmem>>, vector<1x1x128xf32>,
    return
  }
  func.func @transform_0(%arg0: i32, %arg1: i32) -> (i32, i32, i32) {
    %c0_i32 = arith.constant 0 : i32
    %c0_i32_0 = arith.constant 0 : i32
    %c0_i32_1 = arith.constant 0 : i32
    return %c0_i32, %c0_i32_0, %arg1 : i32, i32, i32
  }
  func.func @transform_1(%arg0: i32, %arg1: i32) -> (i32, i32, i32, i32) {
    %c0_i32 = arith.constant 0 : i32
    %c0_i32_0 = arith.constant 0 : i32
    %c0_i32_1 = arith.constant 0 : i32
    %c0_i32_2 = arith.constant 0 : i32
    return %arg0, %c0_i32, %c0_i32_0, %c0_i32_1 : i32, i32, i32, i32
  }
  func.func @transform_2(%arg0: i32, %arg1: i32) -> (i32, i32, i32) {
    %c0_i32 = arith.constant 0 : i32
    %c0_i32_0 = arith.constant 0 : i32
    %c0_i32_1 = arith.constant 0 : i32
    return %arg0, %c0_i32, %c0_i32_0 : i32, i32, i32
  }
  func.func @transform_3(%arg0: i32, %arg1: i32) -> (i32, i32, i32, i32) {
    %c0_i32 = arith.constant 0 : i32
    %c0_i32_0 = arith.constant 0 : i32
    %c0_i32_1 = arith.constant 0 : i32
    %c0_i32_2 = arith.constant 0 : i32
    return %arg0, %c0_i32, %c0_i32_0, %c0_i32_1 : i32, i32, i32, i32
  }
  func.func @transform_4(%arg0: i32, %arg1: i32) -> (i32, i32, i32) {
    %c0_i32 = arith.constant 0 : i32
    %c0_i32_0 = arith.constant 0 : i32
    %c0_i32_1 = arith.constant 0 : i32
    return %arg0, %c0_i32, %c0_i32_0 : i32, i32, i32
  }
  func.func @transform_5(%arg0: i32, %arg1: i32) -> (i32, i32, i32) {
    %c0_i32 = arith.constant 0 : i32
    %c0_i32_0 = arith.constant 0 : i32
    %c0_i32_1 = arith.constant 0 : i32
    return %arg0, %c0_i32, %c0_i32_0 : i32, i32, i32
  }
  func.func @transform_6(%arg0: i32, %arg1: i32) -> (i32, i32, i32) {
    %c0_i32 = arith.constant 0 : i32
    %c0_i32_0 = arith.constant 0 : i32
    %c0_i32_1 = arith.constant 0 : i32
    return %arg0, %c0_i32, %c0_i32_0 : i32, i32, i32
  }
  func.func @transform_7(%arg0: i32, %arg1: i32) -> (i32, i32, i32) {
    %c0_i32 = arith.constant 0 : i32
    %c0_i32_0 = arith.constant 0 : i32
    %c0_i32_1 = arith.constant 0 : i32
    return %arg0, %c0_i32, %c0_i32_0 : i32, i32, i32
  }
  func.func @transform_8(%arg0: i32, %arg1: i32) -> (i32, i32, i32) {
    %c0_i32 = arith.constant 0 : i32
    %c0_i32_0 = arith.constant 0 : i32
    return %arg0, %c0_i32, %arg1 : i32, i32, i32
  }
  func.func @transform_9(%arg0: i32, %arg1: i32) -> (i32, i32, i32) {
    %c0_i32 = arith.constant 0 : i32
    %c0_i32_0 = arith.constant 0 : i32
    return %arg0, %c0_i32, %arg1 : i32, i32, i32
  }
}

</mosaic_0001>

<llo_original>
// kernel: tpu_custom_call.1
$region0: #{tpu_custom_call.1}
  #allocation0 [shape = 'u32[]', space=smem, size = 0x4, offset = 0x4, fixed_abs, tag = 'smem constant byte address 0x4 - core index']
  #allocation1 [shape = 'u32[144,128]{1,0:T(1,128)}', space=vmem, size = 0x12000, scoped, tag = 'internal scratch']
  %s0 = inlined_call_operand.vmem [shape: f32[3,8,128], index: 0, kind: input, shape index: {}]
  %s1 = inlined_call_operand.vmem [shape: f32[2,2,96,8], index: 1, kind: input, shape index: {}]
  %s2 = inlined_call_operand.vmem [shape: f32[2,96,1], index: 2, kind: input, shape index: {}]
  %s3 = inlined_call_operand.vmem [shape: f32[2,2,96,96], index: 3, kind: input, shape index: {}]
  %s4 = inlined_call_operand.vmem [shape: f32[2,96,1], index: 4, kind: input, shape index: {}]
  %s5 = inlined_call_operand.vmem [shape: f32[2,18,96], index: 5, kind: input, shape index: {}]
  %s6 = inlined_call_operand.vmem [shape: f32[2,18,1], index: 6, kind: input, shape index: {}]
  %s7 = inlined_call_operand.vmem [shape: f32[2,3,1], index: 7, kind: input, shape index: {}]
  %s8 = inlined_call_operand.hbm [shape: f32[2,1,128], index: 8, kind: output, shape index: {0}]
  %s9 = inlined_call_operand.hbm [shape: f32[2,1,128], index: 9, kind: output, shape index: {1}]
  %10 = xla_tuple %s8, %s9
  %s11 = sld [smem:[#allocation0]]
  $region73: #{tpu_custom_call.1} parent=0
    _
  %s13 = ssub.s32 1, %s11
  %s14 = scalar_select 0, %s13, %s11
  $region1: #{tpu_custom_call.1} parent=0
    #allocation2 [shape = 'u8[1024]{0}', space=vmem, size = 0x400, scoped, tag = 'output window, operand 0']
    #allocation3 [shape = 's32[2]{0}', space=sflag, size = 0x8, scoped, tag = 'scoped memory for tpu_custom_call.1']
    #allocation4 [shape = 'u8[1024]{0}', space=vmem, size = 0x400, scoped, tag = 'output window, operand 1']
    #allocation5 [shape = 's32[2]{0}', space=sflag, size = 0x8, scoped, tag = 'scoped memory for tpu_custom_call.1']
    %15 = vsyncpa [#allocation3], 0
    %s16 = scalar_lea.sflag [#allocation3], 1
    %17 = vsyncpa %s16, 0
    %18 = vsyncpa [#allocation5], 0
    %s19 = scalar_lea.sflag [#allocation5], 1
    %20 = vsyncpa %s19, 0
    loop: start=0, step=1, limit=4
    $region2: #{tpu_custom_call.1} parent=1 // loop_pre_header
      _
    $region3: #{tpu_custom_call.1} parent=1 // loop_header
      %s22 = sphi 0, %s26
      %p23 = scmp.ge.s32.totalorder %s22, 4
      %s29 = sphi 0, %s41
      %s30 = sphi 0, %s37
      %s31 = sphi 0, %s29
      %s32 = sphi 0, %s30
      %s33 = sphi 0, %s31
      %s34 = sphi 0, %s32
      %s44 = sphi 0, %s46
      %s47 = sphi 0, %s44
      %s48 = sphi 0, %s47
      %s64 = sphi 0, %s48
      %s70 = sphi 0, %s72
      %s73 = sphi 0, %s70
      %s74 = sphi 0, %s73
      %s90 = sphi 0, %s74
      %s96 = sphi 0, %s98
      %s99 = sphi 0, %s96
      %s100 = sphi 0, %s99
      %s116 = sphi 0, %s100
      %s122 = sphi 0, %s124
      %s125 = sphi 0, %s122
      %s126 = sphi 0, %s125
      %s142 = sphi 0, %s126
      %s148 = sphi 0, %s150
      %s151 = sphi 0, %s148
      %s152 = sphi 0, %s151
      %s168 = sphi 0, %s152
      %s174 = sphi 0, %s176
      %s177 = sphi 0, %s174
      %s178 = sphi 0, %s177
      %s194 = sphi 0, %s178
      %s200 = sphi 0, %s202
      %s203 = sphi 0, %s200
      %s204 = sphi 0, %s203
      %s220 = sphi 0, %s204
      %s226 = sphi 0, %s228
      %s229 = sphi 0, %s226
      %s230 = sphi 0, %s229
      %s246 = sphi 0, %s230
      %s254 = sphi 0, %s256
      %s257 = sphi 0, %s254
      %s258 = sphi 0, %s257
      %s274 = sphi 0, %s258
      %s282 = sphi 0, %s284
      %s285 = sphi 0, %s282
      %s286 = sphi 0, %s285
      %s302 = sphi 0, %s286
    $region4: #{tpu_custom_call.1} parent=1 // loop_header_branch
      %25 = sbr.rel (%p23) target = $region8
    $region5: #{tpu_custom_call.1} parent=1 // loop_body
      %s27 = ssub.s32 %s22, 1
      %s28 = ssub.s32 %s22, 2
      %s35 = sadd.s32 1, %s30
      %p36 = scmp.ge.s32.totalorder %s35, 1
      %s37 = scalar_select %p36, 0, %s35
      %s38 = sadd.s32 1, %s29
      %s39 = scalar_select %p36, %s38, %s29
      %p40 = scmp.ge.s32.totalorder %s39, 2
      %s41 = scalar_select %p40, 0, %s39
      %s42 = ssub.s32 %s30, %s37
      %p43 = scmp.eq.s32.totalorder %s42, 0
      %s45 = sadd.s32 %s44, 1
      %s46 = scalar_select %p43, %s44, %s45
      %p49 = pneg %p43
      %p50 = scmp.eq.s32.totalorder %s22, 1
      %p51 = por %p49, %p50
      %p52 = scmp.ne.s32.totalorder %s44, %s47
      %p53 = scmp.eq.s32.totalorder %s22, 0
      %p54 = por %p52, %p53
      %p55 = scmp.ne.s32.totalorder %s44, %s47
      %p56 = scmp.eq.s32.totalorder %s27, 1
      %p57 = por %p55, %p56
      %p58 = scmp.ne.s32.totalorder %s47, %s48
      %p59 = scmp.eq.s32.totalorder %s27, 0
      %p60 = por %p58, %p59
      %p61 = scmp.ne.s32.totalorder %s47, %s48
      %p62 = scmp.eq.s32.totalorder %s28, 1
      %p63 = por %p61, %p62
      %p65 = scmp.ne.s32.totalorder %s48, %s64
      %p66 = scmp.eq.s32.totalorder %s28, 0
      %p67 = por %p65, %p66
      %s68 = ssub.s32 %s29, %s41
      %p69 = scmp.eq.s32.totalorder %s68, 0
      %s71 = sadd.s32 %s70, 1
      %s72 = scalar_select %p69, %s70, %s71
      %p75 = pneg %p69
      %p76 = scmp.eq.s32.totalorder %s22, 1
      %p77 = por %p75, %p76
      %p78 = scmp.ne.s32.totalorder %s70, %s73
      %p79 = scmp.eq.s32.totalorder %s22, 0
      %p80 = por %p78, %p79
      %p81 = scmp.ne.s32.totalorder %s70, %s73
      %p82 = scmp.eq.s32.totalorder %s27, 1
      %p83 = por %p81, %p82
      %p84 = scmp.ne.s32.totalorder %s73, %s74
      %p85 = scmp.eq.s32.totalorder %s27, 0
      %p86 = por %p84, %p85
      %p87 = scmp.ne.s32.totalorder %s73, %s74
      %p88 = scmp.eq.s32.totalorder %s28, 1
      %p89 = por %p87, %p88
      %p91 = scmp.ne.s32.totalorder %s74, %s90
      %p92 = scmp.eq.s32.totalorder %s28, 0
      %p93 = por %p91, %p92
      %s94 = ssub.s32 %s29, %s41
      %p95 = scmp.eq.s32.totalorder %s94, 0
      %s97 = sadd.s32 %s96, 1
      %s98 = scalar_select %p95, %s96, %s97
      %p101 = pneg %p95
      %p102 = scmp.eq.s32.totalorder %s22, 1
      %p103 = por %p101, %p102
      %p104 = scmp.ne.s32.totalorder %s96, %s99
      %p105 = scmp.eq.s32.totalorder %s22, 0
      %p106 = por %p104, %p105
      %p107 = scmp.ne.s32.totalorder %s96, %s99
      %p108 = scmp.eq.s32.totalorder %s27, 1
      %p109 = por %p107, %p108
      %p110 = scmp.ne.s32.totalorder %s99, %s100
      %p111 = scmp.eq.s32.totalorder %s27, 0
      %p112 = por %p110, %p111
      %p113 = scmp.ne.s32.totalorder %s99, %s100
      %p114 = scmp.eq.s32.totalorder %s28, 1
      %p115 = por %p113, %p114
      %p117 = scmp.ne.s32.totalorder %s100, %s116
      %p118 = scmp.eq.s32.totalorder %s28, 0
      %p119 = por %p117, %p118
      %s120 = ssub.s32 %s29, %s41
      %p121 = scmp.eq.s32.totalorder %s120, 0
      %s123 = sadd.s32 %s122, 1
      %s124 = scalar_select %p121, %s122, %s123
      %p127 = pneg %p121
      %p128 = scmp.eq.s32.totalorder %s22, 1
      %p129 = por %p127, %p128
      %p130 = scmp.ne.s32.totalorder %s122, %s125
      %p131 = scmp.eq.s32.totalorder %s22, 0
      %p132 = por %p130, %p131
      %p133 = scmp.ne.s32.totalorder %s122, %s125
      %p134 = scmp.eq.s32.totalorder %s27, 1
      %p135 = por %p133, %p134
      %p136 = scmp.ne.s32.totalorder %s125, %s126
      %p137 = scmp.eq.s32.totalorder %s27, 0
      %p138 = por %p136, %p137
      %p139 = scmp.ne.s32.totalorder %s125, %s126
      %p140 = scmp.eq.s32.totalorder %s28, 1
      %p141 = por %p139, %p140
      %p143 = scmp.ne.s32.totalorder %s126, %s142
      %p144 = scmp.eq.s32.totalorder %s28, 0
      %p145 = por %p143, %p144
      %s146 = ssub.s32 %s29, %s41
      %p147 = scmp.eq.s32.totalorder %s146, 0
      %s149 = sadd.s32 %s148, 1
      %s150 = scalar_select %p147, %s148, %s149
      %p153 = pneg %p147
      %p154 = scmp.eq.s32.totalorder %s22, 1
      %p155 = por %p153, %p154
      %p156 = scmp.ne.s32.totalorder %s148, %s151
      %p157 = scmp.eq.s32.totalorder %s22, 0
      %p158 = por %p156, %p157
      %p159 = scmp.ne.s32.totalorder %s148, %s151
      %p160 = scmp.eq.s32.totalorder %s27, 1
      %p161 = por %p159, %p160
      %p162 = scmp.ne.s32.totalorder %s151, %s152
      %p163 = scmp.eq.s32.totalorder %s27, 0
      %p164 = por %p162, %p163
      %p165 = scmp.ne.s32.totalorder %s151, %s152
      %p166 = scmp.eq.s32.totalorder %s28, 1
      %p167 = por %p165, %p166
      %p169 = scmp.ne.s32.totalorder %s152, %s168
      %p170 = scmp.eq.s32.totalorder %s28, 0
      %p171 = por %p169, %p170
      %s172 = ssub.s32 %s29, %s41
      %p173 = scmp.eq.s32.totalorder %s172, 0
      %s175 = sadd.s32 %s174, 1
      %s176 = scalar_select %p173, %s174, %s175
      %p179 = pneg %p173
      %p180 = scmp.eq.s32.totalorder %s22, 1
      %p181 = por %p179, %p180
      %p182 = scmp.ne.s32.totalorder %s174, %s177
      %p183 = scmp.eq.s32.totalorder %s22, 0
      %p184 = por %p182, %p183
      %p185 = scmp.ne.s32.totalorder %s174, %s177
      %p186 = scmp.eq.s32.totalorder %s27, 1
      %p187 = por %p185, %p186
      %p188 = scmp.ne.s32.totalorder %s177, %s178
      %p189 = scmp.eq.s32.totalorder %s27, 0
      %p190 = por %p188, %p189
      %p191 = scmp.ne.s32.totalorder %s177, %s178
      %p192 = scmp.eq.s32.totalorder %s28, 1
      %p193 = por %p191, %p192
      %p195 = scmp.ne.s32.totalorder %s178, %s194
      %p196 = scmp.eq.s32.totalorder %s28, 0
      %p197 = por %p195, %p196
      %s198 = ssub.s32 %s29, %s41
      %p199 = scmp.eq.s32.totalorder %s198, 0
      %s201 = sadd.s32 %s200, 1
      %s202 = scalar_select %p199, %s200, %s201
      %p205 = pneg %p199
      %p206 = scmp.eq.s32.totalorder %s22, 1
      %p207 = por %p205, %p206
      %p208 = scmp.ne.s32.totalorder %s200, %s203
      %p209 = scmp.eq.s32.totalorder %s22, 0
      %p210 = por %p208, %p209
      %p211 = scmp.ne.s32.totalorder %s200, %s203
      %p212 = scmp.eq.s32.totalorder %s27, 1
      %p213 = por %p211, %p212
      %p214 = scmp.ne.s32.totalorder %s203, %s204
      %p215 = scmp.eq.s32.totalorder %s27, 0
      %p216 = por %p214, %p215
      %p217 = scmp.ne.s32.totalorder %s203, %s204
      %p218 = scmp.eq.s32.totalorder %s28, 1
      %p219 = por %p217, %p218
      %p221 = scmp.ne.s32.totalorder %s204, %s220
      %p222 = scmp.eq.s32.totalorder %s28, 0
      %p223 = por %p221, %p222
      %s224 = ssub.s32 %s29, %s41
      %p225 = scmp.eq.s32.totalorder %s224, 0
      %s227 = sadd.s32 %s226, 1
      %s228 = scalar_select %p225, %s226, %s227
      %p231 = pneg %p225
      %p232 = scmp.eq.s32.totalorder %s22, 1
      %p233 = por %p231, %p232
      %p234 = scmp.ne.s32.totalorder %s226, %s229
      %p235 = scmp.eq.s32.totalorder %s22, 0
      %p236 = por %p234, %p235
      %p237 = scmp.ne.s32.totalorder %s226, %s229
      %p238 = scmp.eq.s32.totalorder %s27, 1
      %p239 = por %p237, %p238
      %p240 = scmp.ne.s32.totalorder %s229, %s230
      %p241 = scmp.eq.s32.totalorder %s27, 0
      %p242 = por %p240, %p241
      %p243 = scmp.ne.s32.totalorder %s229, %s230
      %p244 = scmp.eq.s32.totalorder %s28, 1
      %p245 = por %p243, %p244
      %p247 = scmp.ne.s32.totalorder %s230, %s246
      %p248 = scmp.eq.s32.totalorder %s28, 0
      %p249 = por %p247, %p248
      %s250 = ssub.s32 %s29, %s41
      %s251 = ssub.s32 %s30, %s37
      %s252 = sor.u32 %s250, %s251
      %p253 = scmp.eq.s32.totalorder %s252, 0
      %s255 = sadd.s32 %s254, 1
      %s256 = scalar_select %p253, %s254, %s255
      %p259 = pneg %p253
      %p260 = scmp.eq.s32.totalorder %s22, 1
      %p261 = por %p259, %p260
      %p262 = scmp.ne.s32.totalorder %s254, %s257
      %p263 = scmp.eq.s32.totalorder %s22, 0
      %p264 = por %p262, %p263
      %p265 = scmp.ne.s32.totalorder %s254, %s257
      %p266 = scmp.eq.s32.totalorder %s27, 1
      %p267 = por %p265, %p266
      %p268 = scmp.ne.s32.totalorder %s257, %s258
      %p269 = scmp.eq.s32.totalorder %s27, 0
      %p270 = por %p268, %p269
      %p271 = scmp.ne.s32.totalorder %s257, %s258
      %p272 = scmp.eq.s32.totalorder %s28, 1
      %p273 = por %p271, %p272
      %p275 = scmp.ne.s32.totalorder %s258, %s274
      %p276 = scmp.eq.s32.totalorder %s28, 0
      %p277 = por %p275, %p276
      %s278 = ssub.s32 %s29, %s41
      %s279 = ssub.s32 %s30, %s37
      %s280 = sor.u32 %s278, %s279
      %p281 = scmp.eq.s32.totalorder %s280, 0
      %s283 = sadd.s32 %s282, 1
      %s284 = scalar_select %p281, %s282, %s283
      %p287 = pneg %p281
      %p288 = scmp.eq.s32.totalorder %s22, 1
      %p289 = por %p287, %p288
      %p290 = scmp.ne.s32.totalorder %s282, %s285
      %p291 = scmp.eq.s32.totalorder %s22, 0
      %p292 = por %p290, %p291
      %p293 = scmp.ne.s32.totalorder %s282, %s285
      %p294 = scmp.eq.s32.totalorder %s27, 1
      %p295 = por %p293, %p294
      %p296 = scmp.ne.s32.totalorder %s285, %s286
      %p297 = scmp.eq.s32.totalorder %s27, 0
      %p298 = por %p296, %p297
      %p299 = scmp.ne.s32.totalorder %s285, %s286
      %p300 = scmp.eq.s32.totalorder %s28, 1
      %p301 = por %p299, %p300
      %p303 = scmp.ne.s32.totalorder %s286, %s302
      %p304 = scmp.eq.s32.totalorder %s28, 0
      %p305 = por %p303, %p304
      %p306 = scmp.le.s32.totalorder 1, %s22
      %p307 = scmp.lt.s32.totalorder %s22, 3
      %p308 = pnand %p306, %p307
      %p309 = pneg %p308
      // Predicated region
      $region9: #{tpu_custom_call.1} parent=5 // pred_check
        _
      $region10: #{tpu_custom_call.1} parent=5 // pred_check_branch
        %311 = sbr.rel (%p308) target = $region12
      $region11: #{tpu_custom_call.1} parent=5 // pred_region
        %s312 = ssub.s32 %s22, 1
        // Predicated region
        $region13: #{tpu_custom_call.1} parent=11 // pred_check
          %p313 = pneg %p60
        $region14: #{tpu_custom_call.1} parent=11 // pred_check_branch
          %315 = sbr.rel (%p313) target = $region16
        $region15: #{tpu_custom_call.1} parent=11 // pred_region
          %p316 = scmp.lt.s32.totalorder %s32, 0
          %s317 = scalar_select %p316, %s32, 0
          %s318 = smul.addr %s317, 8
          %s319 = scalar_lea.vmem %s0, %s318
        $region16: #{tpu_custom_call.1} parent=11 // pred_fallthru
          _
      $region12: #{tpu_custom_call.1} parent=5 // pred_fallthru
        _
      %p320 = scmp.lt.s32.totalorder %s22, 2
      // Predicated region
      $region17: #{tpu_custom_call.1} parent=5 // pred_check
        %p321 = pneg %p320
      $region18: #{tpu_custom_call.1} parent=5 // pred_check_branch
        %323 = sbr.rel (%p321) target = $region20
      $region19: #{tpu_custom_call.1} parent=5 // pred_region
        // Predicated region
        $region21: #{tpu_custom_call.1} parent=19 // pred_check
          %p324 = pneg %p80
        $region22: #{tpu_custom_call.1} parent=19 // pred_check_branch
          %326 = sbr.rel (%p324) target = $region24
        $region23: #{tpu_custom_call.1} parent=19 // pred_region
          %p327 = scmp.lt.s32.totalorder %s29, 1
          %s328 = scalar_select %p327, %s29, 1
          %s329 = smul.addr %s328, 24
          %s330 = smul.addr %s329, 8
          %s331 = scalar_lea.vmem %s1, %s330
        $region24: #{tpu_custom_call.1} parent=19 // pred_fallthru
          _
        // Predicated region
        $region25: #{tpu_custom_call.1} parent=19 // pred_check
          %p332 = pneg %p106
        $region26: #{tpu_custom_call.1} parent=19 // pred_check_branch
          %334 = sbr.rel (%p332) target = $region28
        $region27: #{tpu_custom_call.1} parent=19 // pred_region
          %p335 = scmp.lt.s32.totalorder %s29, 1
          %s336 = scalar_select %p335, %s29, 1
          %s337 = smul.addr %s336, 12
          %s338 = smul.addr %s337, 8
          %s339 = scalar_lea.vmem %s2, %s338
        $region28: #{tpu_custom_call.1} parent=19 // pred_fallthru
          _
        // Predicated region
        $region29: #{tpu_custom_call.1} parent=19 // pred_check
          %p340 = pneg %p132
        $region30: #{tpu_custom_call.1} parent=19 // pred_check_branch
          %342 = sbr.rel (%p340) target = $region32
        $region31: #{tpu_custom_call.1} parent=19 // pred_region
          %p343 = scmp.lt.s32.totalorder %s29, 1
          %s344 = scalar_select %p343, %s29, 1
          %s345 = smul.addr %s344, 24
          %s346 = smul.addr %s345, 8
          %s347 = scalar_lea.vmem %s3, %s346
        $region32: #{tpu_custom_call.1} parent=19 // pred_fallthru
          _
        // Predicated region
        $region33: #{tpu_custom_call.1} parent=19 // pred_check
          %p348 = pneg %p158
        $region34: #{tpu_custom_call.1} parent=19 // pred_check_branch
          %350 = sbr.rel (%p348) target = $region36
        $region35: #{tpu_custom_call.1} parent=19 // pred_region
          %p351 = scmp.lt.s32.totalorder %s29, 1
          %s352 = scalar_select %p351, %s29, 1
          %s353 = smul.addr %s352, 12
          %s354 = smul.addr %s353, 8
          %s355 = scalar_lea.vmem %s4, %s354
        $region36: #{tpu_custom_call.1} parent=19 // pred_fallthru
          _
        // Predicated region
        $region37: #{tpu_custom_call.1} parent=19 // pred_check
          %p356 = pneg %p184
        $region38: #{tpu_custom_call.1} parent=19 // pred_check_branch
          %358 = sbr.rel (%p356) target = $region40
        $region39: #{tpu_custom_call.1} parent=19 // pred_region
          %p359 = scmp.lt.s32.totalorder %s29, 1
          %s360 = scalar_select %p359, %s29, 1
          %s361 = smul.addr %s360, 3
          %s362 = smul.addr %s361, 8
          %s363 = scalar_lea.vmem %s5, %s362
        $region40: #{tpu_custom_call.1} parent=19 // pred_fallthru
          _
        // Predicated region
        $region41: #{tpu_custom_call.1} parent=19 // pred_check
          %p364 = pneg %p210
        $region42: #{tpu_custom_call.1} parent=19 // pred_check_branch
          %366 = sbr.rel (%p364) target = $region44
        $region43: #{tpu_custom_call.1} parent=19 // pred_region
          %p367 = scmp.lt.s32.totalorder %s29, 1
          %s368 = scalar_select %p367, %s29, 1
          %s369 = smul.addr %s368, 3
          %s370 = smul.addr %s369, 8
          %s371 = scalar_lea.vmem %s6, %s370
        $region44: #{tpu_custom_call.1} parent=19 // pred_fallthru
          _
        // Predicated region
        $region45: #{tpu_custom_call.1} parent=19 // pred_check
          %p372 = pneg %p236
        $region46: #{tpu_custom_call.1} parent=19 // pred_check_branch
          %374 = sbr.rel (%p372) target = $region48
        $region47: #{tpu_custom_call.1} parent=19 // pred_region
          %p375 = scmp.lt.s32.totalorder %s29, 1
          %s376 = scalar_select %p375, %s29, 1
          %s377 = smul.addr %s376, 4
          %s378 = scalar_lea.vmem %s7, %s377
        $region48: #{tpu_custom_call.1} parent=19 // pred_fallthru
          _
      $region20: #{tpu_custom_call.1} parent=5 // pred_fallthru
        _
      %p379 = scmp.le.s32.totalorder 1, %s22
      %p380 = scmp.lt.s32.totalorder %s22, 3
      %p381 = pnand %p379, %p380
      %p382 = pneg %p381
      // Predicated region
      $region49: #{tpu_custom_call.1} parent=5 // pred_check
        _
      $region50: #{tpu_custom_call.1} parent=5 // pred_check_branch
        %384 = sbr.rel (%p381) target = $region52
      $region51: #{tpu_custom_call.1} parent=5 // pred_region
        %s385 = ssub.s32 %s22, 1
        %p386 = scmp.lt.s32.totalorder %s32, 0
        %s387 = scalar_select %p386, %s32, 0
        %s388 = smul.addr %s387, 8
        %s389 = scalar_lea.vmem %s0, %s388
        %p390 = pneg %p60
        %p391 = pneg %p57
        %p392 = scmp.lt.s32.totalorder %s31, 1
        %s393 = scalar_select %p392, %s31, 1
        %s394 = smul.addr %s393, 24
        %s395 = smul.addr %s394, 8
        %s396 = scalar_lea.vmem %s1, %s395
        %p397 = pneg %p86
        %p398 = pneg %p83
        %p399 = scmp.lt.s32.totalorder %s31, 1
        %s400 = scalar_select %p399, %s31, 1
        %s401 = smul.addr %s400, 12
        %s402 = smul.addr %s401, 8
        %s403 = scalar_lea.vmem %s2, %s402
        %p404 = pneg %p112
        %p405 = pneg %p109
        %p406 = scmp.lt.s32.totalorder %s31, 1
        %s407 = scalar_select %p406, %s31, 1
        %s408 = smul.addr %s407, 24
        %s409 = smul.addr %s408, 8
        %s410 = scalar_lea.vmem %s3, %s409
        %p411 = pneg %p138
        %p412 = pneg %p135
        %p413 = scmp.lt.s32.totalorder %s31, 1
        %s414 = scalar_select %p413, %s31, 1
        %s415 = smul.addr %s414, 12
        %s416 = smul.addr %s415, 8
        %s417 = scalar_lea.vmem %s4, %s416
        %p418 = pneg %p164
        %p419 = pneg %p161
        %p420 = scmp.lt.s32.totalorder %s31, 1
        %s421 = scalar_select %p420, %s31, 1
        %s422 = smul.addr %s421, 3
        %s423 = smul.addr %s422, 8
        %s424 = scalar_lea.vmem %s5, %s423
        %p425 = pneg %p190
        %p426 = pneg %p187
        %p427 = scmp.lt.s32.totalorder %s31, 1
        %s428 = scalar_select %p427, %s31, 1
        %s429 = smul.addr %s428, 3
        %s430 = smul.addr %s429, 8
        %s431 = scalar_lea.vmem %s6, %s430
        %p432 = pneg %p216
        %p433 = pneg %p213
        %p434 = scmp.lt.s32.totalorder %s31, 1
        %s435 = scalar_select %p434, %s31, 1
        %s436 = smul.addr %s435, 4
        %s437 = scalar_lea.vmem %s7, %s436
        %p438 = pneg %p242
        %p439 = pneg %p239
        %p440 = pneg %p270
        %p441 = pneg %p267
        %s442 = sand.u32 %s257, 1
        %s443 = scalar_lea.sflag [#allocation3], %s442
        %s444 = sand.u32 %s257, 1
        %s445 = scalar_lea.vmem [#allocation2], %s444
        %p446 = pneg %p298
        %p447 = pneg %p295
        %s448 = sand.u32 %s285, 1
        %s449 = scalar_lea.sflag [#allocation5], %s448
        %s450 = sand.u32 %s285, 1
        %s451 = scalar_lea.vmem [#allocation4], %s450
        %p452 = scmp.lt.s32.totalorder %s32, 0
        %s453 = scalar_select %p452, %s32, 0
        %s454 = smul.addr %s453, 8
        %s455 = scalar_lea.vmem %s0, %s454
        %p456 = scmp.lt.s32.totalorder %s31, 1
        %s457 = scalar_select %p456, %s31, 1
        %s458 = smul.addr %s457, 24
        %s459 = smul.addr %s458, 8
        %s460 = scalar_lea.vmem %s1, %s459
        %p461 = scmp.lt.s32.totalorder %s31, 1
        %s462 = scalar_select %p461, %s31, 1
        %s463 = smul.addr %s462, 12
        %s464 = smul.addr %s463, 8
        %s465 = scalar_lea.vmem %s2, %s464
        %p466 = scmp.lt.s32.totalorder %s31, 1
        %s467 = scalar_select %p466, %s31, 1
        %s468 = smul.addr %s467, 24
        %s469 = smul.addr %s468, 8
        %s470 = scalar_lea.vmem %s3, %s469
        %p471 = scmp.lt.s32.totalorder %s31, 1
        %s472 = scalar_select %p471, %s31, 1
        %s473 = smul.addr %s472, 12
        %s474 = smul.addr %s473, 8
        %s475 = scalar_lea.vmem %s4, %s474
        %p476 = scmp.lt.s32.totalorder %s31, 1
        %s477 = scalar_select %p476, %s31, 1
        %s478 = smul.addr %s477, 3
        %s479 = smul.addr %s478, 8
        %s480 = scalar_lea.vmem %s5, %s479
        %p481 = scmp.lt.s32.totalorder %s31, 1
        %s482 = scalar_select %p481, %s31, 1
        %s483 = smul.addr %s482, 3
        %s484 = smul.addr %s483, 8
        %s485 = scalar_lea.vmem %s6, %s484
        %p486 = scmp.lt.s32.totalorder %s31, 1
        %s487 = scalar_select %p486, %s31, 1
        %s488 = smul.addr %s487, 4
        %s489 = scalar_lea.vmem %s7, %s488
        %v490 = vlaneseq
        %v491 = vand.u32 %v490, 127
        %vm492 = vcmp.lt.s32.totalorder %v491, 0
        %v493 = vsub.s32 0, %v491
        %v494 = vsel %vm492, %v493, %v491
        %v495 = vshrl.u32 %v494, 4
        %v496 = vand.u32 %v494, 15
        %v497 = vsub.s32 0, %v496
        %v498 = vsel %vm492, %v497, %v496
        %vm499 = vcmp.ne.s32.totalorder %v498, 0
        %vm500 = vcmp.lt.s32.totalorder %v498, 0
        %vm501 = vmand %vm500, %vm499
        %v502 = vadd.s32 %v498, 16
        %v503 = vsel %vm501, %v502, %v498
        %vm504 = vcmp.lt.s32.totalorder %v491, 32
        %v505 = vld [vmem:[%s460] sm:$0xff]
        %v506 = vld [vmem:[%s460 + $0x8] sm:$0xff]
        %v507 = vld [vmem:[%s460 + $0x10] sm:$0xff]
        %v508 = vld [vmem:[%s460 + $0x18] sm:$0xff]
        %v509 = vld [vmem:[%s460 + $0x20] sm:$0xff]
        %v510 = vld [vmem:[%s460 + $0x28] sm:$0xff]
        %v511 = vld [vmem:[%s460 + $0x30] sm:$0xff]
        %v512 = vld [vmem:[%s460 + $0x38] sm:$0xff]
        %v513 = vld [vmem:[%s460 + $0x40] sm:$0xff]
        %v514 = vld [vmem:[%s460 + $0x48] sm:$0xff]
        %v515 = vld [vmem:[%s460 + $0x50] sm:$0xff]
        %v516 = vld [vmem:[%s460 + $0x58] sm:$0xff]
        %v517 = vld [vmem:[%s460 + $0x60] sm:$0xff]
        %v518 = vld [vmem:[%s460 + $0x68] sm:$0xff]
        %v519 = vld [vmem:[%s460 + $0x70] sm:$0xff]
        %v520 = vld [vmem:[%s460 + $0x78] sm:$0xff]
        %v521 = vld [vmem:[%s460 + $0x80] sm:$0xff]
        %v522 = vld [vmem:[%s460 + $0x88] sm:$0xff]
        %v523 = vld [vmem:[%s460 + $0x90] sm:$0xff]
        %v524 = vld [vmem:[%s460 + $0x98] sm:$0xff]
        %v525 = vld [vmem:[%s460 + $0xa0] sm:$0xff]
        %v526 = vld [vmem:[%s460 + $0xa8] sm:$0xff]
        %v527 = vld [vmem:[%s460 + $0xb0] sm:$0xff]
        %v528 = vld [vmem:[%s460 + $0xb8] sm:$0xff]
        %v529 = vld [vmem:[%s455] sm:$0xff]
        %s530 = scalar_lea.vmem %s455, 8
        %v531 = vld [vmem:[%s530] sm:$0xff]
        %vm532 = vcmask 64512
        %v534 = vsel %vm532, %v517, 0
        %v537 = vsel %vm532, %v518, 0
        %v540 = vsel %vm532, %v519, 0
        %v543 = vsel %vm532, %v520, 0
        %v546 = vsel %vm532, %v521, 0
        %v549 = vsel %vm532, %v522, 0
        %v552 = vsel %vm532, %v523, 0
        %v555 = vsel %vm532, %v524, 0
        %v558 = vsel %vm532, %v525, 0
        %v561 = vsel %vm532, %v526, 0
        %v564 = vsel %vm532, %v527, 0
        %v567 = vsel %vm532, %v528, 0
        %569 = vmatprep.subr.mxu0 0.0
        %570 = vmatpush1.msra.mxu0 0.0
        %571 = vmatprep.subr.mxu0 0.0
        %572 = vmatpush1.msra.mxu0 0.0
        %573 = vmatprep.subr.mxu0 0.0
        %574 = vmatpush1.msra.mxu0 0.0
        %575 = vmatprep.subr.mxu0 0.0
        %576 = vmatpush1.msra.mxu0 0.0
        %577 = vmatprep.subr.mxu0 0.0
        %578 = vmatpush1.msra.mxu0 0.0
        %579 = vmatprep.subr.mxu0 0.0
        %580 = vmatpush1.msra.mxu0 0.0
        %581 = vmatprep.subr.mxu0 0.0
        %582 = vmatpush1.msra.mxu0 0.0
        %583 = vmatprep.subr.mxu0 0.0
        %584 = vmatpush1.msra.mxu0 0.0
        %585 = vmatprep.subr.mxu0 0.0
        %586 = vmatpush1.msra.mxu0 0.0
        %587 = vmatprep.subr.mxu0 0.0
        %588 = vmatpush1.msra.mxu0 0.0
        %589 = vmatprep.subr.mxu0 0.0
        %590 = vmatpush1.msra.mxu0 0.0
        %591 = vmatprep.subr.mxu0 0.0
        %592 = vmatpush1.msra.mxu0 0.0
        %593 = vmatprep.subr.mxu0 0.0
        %594 = vmatpush1.msra.mxu0 0.0
        %595 = vmatprep.subr.mxu0 0.0
        %596 = vmatpush1.msra.mxu0 0.0
        %597 = vmatprep.subr.mxu0 0.0
        %598 = vmatpush1.msra.mxu0 0.0
        %599 = vmatprep.subr.mxu0 0.0
        %600 = vmatpush1.msra.mxu0 %v531
        %601 = vmatprep.subr.mxu0 0.0
        %602 = vmatpush2.msra.mxu0 0.0
        %603 = vmatprep.subr.mxu0 0.0
        %604 = vmatpush2.msra.mxu0 0.0
        %605 = vmatprep.subr.mxu0 0.0
        %606 = vmatpush2.msra.mxu0 0.0
        %607 = vmatprep.subr.mxu0 0.0
        %608 = vmatpush2.msra.mxu0 0.0
        %609 = vmatprep.subr.mxu0 0.0
        %610 = vmatpush2.msra.mxu0 0.0
        %611 = vmatprep.subr.mxu0 0.0
        %612 = vmatpush2.msra.mxu0 0.0
        %613 = vmatprep.subr.mxu0 0.0
        %614 = vmatpush2.msra.mxu0 0.0
        %615 = vmatprep.subr.mxu0 0.0
        %616 = vmatpush2.msra.mxu0 0.0
        %617 = vmatprep.subr.mxu0 0.0
        %618 = vmatpush2.msra.mxu0 0.0
        %619 = vmatprep.subr.mxu0 0.0
        %620 = vmatpush2.msra.mxu0 0.0
        %621 = vmatprep.subr.mxu0 0.0
        %622 = vmatpush2.msra.mxu0 0.0
        %623 = vmatprep.subr.mxu0 0.0
        %624 = vmatpush2.msra.mxu0 0.0
        %625 = vmatprep.subr.mxu0 0.0
        %626 = vmatpush2.msra.mxu0 0.0
        %627 = vmatprep.subr.mxu0 0.0
        %628 = vmatpush2.msra.mxu0 0.0
        %629 = vmatprep.subr.mxu0 0.0
        %630 = vmatpush2.msra.mxu0 0.0
        %631 = vmatprep.subr.mxu0 0.0
        %632 = vmatpush2.msra.mxu0 0.0
        %633 = vmatprep.mubr.f32.mxu0 0.0
        %634 = vmatmul.mubr.f32.gmra.mxu0 %v534
        %v635 = vpop.f32.mrf.mxu0
        %v636 = vadd.f32 0.0, %v635
        %v637 = vpop.f32.mrf.mxu0
        %638 = vmatprep.mubr.f32.mxu0 0.0
        %639 = vmatmul.mubr.f32.gmra.mxu0 %v537
        %v640 = vpop.f32.mrf.mxu0
        %v641 = vadd.f32 0.0, %v640
        %v642 = vpop.f32.mrf.mxu0
        %643 = vmatprep.mubr.f32.mxu0 0.0
        %644 = vmatmul.mubr.f32.gmra.mxu0 %v540
        %v645 = vpop.f32.mrf.mxu0
        %v646 = vadd.f32 0.0, %v645
        %v647 = vpop.f32.mrf.mxu0
        %648 = vmatprep.mubr.f32.mxu0 0.0
        %649 = vmatmul.mubr.f32.gmra.mxu0 %v543
        %v650 = vpop.f32.mrf.mxu0
        %v651 = vadd.f32 0.0, %v650
        %v652 = vpop.f32.mrf.mxu0
        %653 = vmatprep.mubr.f32.mxu0 0.0
        %654 = vmatmul.mubr.f32.gmra.mxu0 %v546
        %v655 = vpop.f32.mrf.mxu0
        %v656 = vadd.f32 0.0, %v655
        %v657 = vpop.f32.mrf.mxu0
        %658 = vmatprep.mubr.f32.mxu0 0.0
        %659 = vmatmul.mubr.f32.gmra.mxu0 %v549
        %v660 = vpop.f32.mrf.mxu0
        %v661 = vadd.f32 0.0, %v660
        %v662 = vpop.f32.mrf.mxu0
        %663 = vmatprep.mubr.f32.mxu0 0.0
        %664 = vmatmul.mubr.f32.gmra.mxu0 %v552
        %v665 = vpop.f32.mrf.mxu0
        %v666 = vadd.f32 0.0, %v665
        %v667 = vpop.f32.mrf.mxu0
        %668 = vmatprep.mubr.f32.mxu0 0.0
        %669 = vmatmul.mubr.f32.gmra.mxu0 %v555
        %v670 = vpop.f32.mrf.mxu0
        %v671 = vadd.f32 0.0, %v670
        %v672 = vpop.f32.mrf.mxu0
        %673 = vmatprep.mubr.f32.mxu0 0.0
        %674 = vmatmul.mubr.f32.gmra.mxu0 %v558
        %v675 = vpop.f32.mrf.mxu0
        %v676 = vadd.f32 0.0, %v675
        %v677 = vpop.f32.mrf.mxu0
        %678 = vmatprep.mubr.f32.mxu0 0.0
        %679 = vmatmul.mubr.f32.gmra.mxu0 %v561
        %v680 = vpop.f32.mrf.mxu0
        %v681 = vadd.f32 0.0, %v680
        %v682 = vpop.f32.mrf.mxu0
        %683 = vmatprep.mubr.f32.mxu0 0.0
        %684 = vmatmul.mubr.f32.gmra.mxu0 %v564
        %v685 = vpop.f32.mrf.mxu0
        %v686 = vadd.f32 0.0, %v685
        %v687 = vpop.f32.mrf.mxu0
        %688 = vmatprep.mubr.f32.mxu0 0.0
        %689 = vmatmul.mubr.f32.gmra.mxu0 %v567
        %v690 = vpop.f32.mrf.mxu0
        %v691 = vadd.f32 0.0, %v690
        %v692 = vpop.f32.mrf.mxu0
        %693 = vdwg.mxu0
        %v695 = vsel %vm532, %v505, 0
        %v698 = vsel %vm532, %v506, 0
        %v701 = vsel %vm532, %v507, 0
        %v704 = vsel %vm532, %v508, 0
        %v707 = vsel %vm532, %v509, 0
        %v710 = vsel %vm532, %v510, 0
        %v713 = vsel %vm532, %v511, 0
        %v716 = vsel %vm532, %v512, 0
        %v719 = vsel %vm532, %v513, 0
        %v722 = vsel %vm532, %v514, 0
        %v725 = vsel %vm532, %v515, 0
        %v728 = vsel %vm532, %v516, 0
        %730 = vmatprep.subr.mxu0 0.0
        %731 = vmatpush1.msra.mxu0 0.0
        %732 = vmatprep.subr.mxu0 0.0
        %733 = vmatpush1.msra.mxu0 0.0
        %734 = vmatprep.subr.mxu0 0.0
        %735 = vmatpush1.msra.mxu0 0.0
        %736 = vmatprep.subr.mxu0 0.0
        %737 = vmatpush1.msra.mxu0 0.0
        %738 = vmatprep.subr.mxu0 0.0
        %739 = vmatpush1.msra.mxu0 0.0
        %740 = vmatprep.subr.mxu0 0.0
        %741 = vmatpush1.msra.mxu0 0.0
        %742 = vmatprep.subr.mxu0 0.0
        %743 = vmatpush1.msra.mxu0 0.0
        %744 = vmatprep.subr.mxu0 0.0
        %745 = vmatpush1.msra.mxu0 0.0
        %746 = vmatprep.subr.mxu0 0.0
        %747 = vmatpush1.msra.mxu0 0.0
        %748 = vmatprep.subr.mxu0 0.0
        %749 = vmatpush1.msra.mxu0 0.0
        %750 = vmatprep.subr.mxu0 0.0
        %751 = vmatpush1.msra.mxu0 0.0
        %752 = vmatprep.subr.mxu0 0.0
        %753 = vmatpush1.msra.mxu0 0.0
        %754 = vmatprep.subr.mxu0 0.0
        %755 = vmatpush1.msra.mxu0 0.0
        %756 = vmatprep.subr.mxu0 0.0
        %757 = vmatpush1.msra.mxu0 0.0
        %758 = vmatprep.subr.mxu0 0.0
        %759 = vmatpush1.msra.mxu0 0.0
        %760 = vmatprep.subr.mxu0 0.0
        %761 = vmatpush1.msra.mxu0 %v529
        %762 = vmatprep.subr.mxu0 0.0
        %763 = vmatpush2.msra.mxu0 0.0
        %764 = vmatprep.subr.mxu0 0.0
        %765 = vmatpush2.msra.mxu0 0.0
        %766 = vmatprep.subr.mxu0 0.0
        %767 = vmatpush2.msra.mxu0 0.0
        %768 = vmatprep.subr.mxu0 0.0
        %769 = vmatpush2.msra.mxu0 0.0
        %770 = vmatprep.subr.mxu0 0.0
        %771 = vmatpush2.msra.mxu0 0.0
        %772 = vmatprep.subr.mxu0 0.0
        %773 = vmatpush2.msra.mxu0 0.0
        %774 = vmatprep.subr.mxu0 0.0
        %775 = vmatpush2.msra.mxu0 0.0
        %776 = vmatprep.subr.mxu0 0.0
        %777 = vmatpush2.msra.mxu0 0.0
        %778 = vmatprep.subr.mxu0 0.0
        %779 = vmatpush2.msra.mxu0 0.0
        %780 = vmatprep.subr.mxu0 0.0
        %781 = vmatpush2.msra.mxu0 0.0
        %782 = vmatprep.subr.mxu0 0.0
        %783 = vmatpush2.msra.mxu0 0.0
        %784 = vmatprep.subr.mxu0 0.0
        %785 = vmatpush2.msra.mxu0 0.0
        %786 = vmatprep.subr.mxu0 0.0
        %787 = vmatpush2.msra.mxu0 0.0
        %788 = vmatprep.subr.mxu0 0.0
        %789 = vmatpush2.msra.mxu0 0.0
        %790 = vmatprep.subr.mxu0 0.0
        %791 = vmatpush2.msra.mxu0 0.0
        %792 = vmatprep.subr.mxu0 0.0
        %793 = vmatpush2.msra.mxu0 0.0
        %794 = vmatprep.mubr.f32.mxu0 0.0
        %795 = vmatmul.mubr.f32.gmra.mxu0 %v695
        %v796 = vpop.f32.mrf.mxu0
        %v797 = vadd.f32 %v636, %v796
        %v798 = vpop.f32.mrf.mxu0
        %799 = vmatprep.mubr.f32.mxu0 0.0
        %800 = vmatmul.mubr.f32.gmra.mxu0 %v698
        %v801 = vpop.f32.mrf.mxu0
        %v802 = vadd.f32 %v641, %v801
        %v803 = vpop.f32.mrf.mxu0
        %804 = vmatprep.mubr.f32.mxu0 0.0
        %805 = vmatmul.mubr.f32.gmra.mxu0 %v701
        %v806 = vpop.f32.mrf.mxu0
        %v807 = vadd.f32 %v646, %v806
        %v808 = vpop.f32.mrf.mxu0
        %809 = vmatprep.mubr.f32.mxu0 0.0
        %810 = vmatmul.mubr.f32.gmra.mxu0 %v704
        %v811 = vpop.f32.mrf.mxu0
        %v812 = vadd.f32 %v651, %v811
        %v813 = vpop.f32.mrf.mxu0
        %814 = vmatprep.mubr.f32.mxu0 0.0
        %815 = vmatmul.mubr.f32.gmra.mxu0 %v707
        %v816 = vpop.f32.mrf.mxu0
        %v817 = vadd.f32 %v656, %v816
        %v818 = vpop.f32.mrf.mxu0
        %819 = vmatprep.mubr.f32.mxu0 0.0
        %820 = vmatmul.mubr.f32.gmra.mxu0 %v710
        %v821 = vpop.f32.mrf.mxu0
        %v822 = vadd.f32 %v661, %v821
        %v823 = vpop.f32.mrf.mxu0
        %824 = vmatprep.mubr.f32.mxu0 0.0
        %825 = vmatmul.mubr.f32.gmra.mxu0 %v713
        %v826 = vpop.f32.mrf.mxu0
        %v827 = vadd.f32 %v666, %v826
        %v828 = vpop.f32.mrf.mxu0
        %829 = vmatprep.mubr.f32.mxu0 0.0
        %830 = vmatmul.mubr.f32.gmra.mxu0 %v716
        %v831 = vpop.f32.mrf.mxu0
        %v832 = vadd.f32 %v671, %v831
        %v833 = vpop.f32.mrf.mxu0
        %834 = vmatprep.mubr.f32.mxu0 0.0
        %835 = vmatmul.mubr.f32.gmra.mxu0 %v719
        %v836 = vpop.f32.mrf.mxu0
        %v837 = vadd.f32 %v676, %v836
        %v838 = vpop.f32.mrf.mxu0
        %839 = vmatprep.mubr.f32.mxu0 0.0
        %840 = vmatmul.mubr.f32.gmra.mxu0 %v722
        %v841 = vpop.f32.mrf.mxu0
        %v842 = vadd.f32 %v681, %v841
        %v843 = vpop.f32.mrf.mxu0
        %844 = vmatprep.mubr.f32.mxu0 0.0
        %845 = vmatmul.mubr.f32.gmra.mxu0 %v725
        %v846 = vpop.f32.mrf.mxu0
        %v847 = vadd.f32 %v686, %v846
        %v848 = vpop.f32.mrf.mxu0
        %849 = vmatprep.mubr.f32.mxu0 0.0
        %850 = vmatmul.mubr.f32.gmra.mxu0 %v728
        %v851 = vpop.f32.mrf.mxu0
        %v852 = vadd.f32 %v691, %v851
        %v853 = vpop.f32.mrf.mxu0
        %854 = vdwg.mxu0
        %v855 = vld [vmem:[%s465] sm:$0xff]
        %v856 = vld [vmem:[%s465 + $0x8] sm:$0xff]
        %v857 = vld [vmem:[%s465 + $0x10] sm:$0xff]
        %v858 = vld [vmem:[%s465 + $0x18] sm:$0xff]
        %v859 = vld [vmem:[%s465 + $0x20] sm:$0xff]
        %v860 = vld [vmem:[%s465 + $0x28] sm:$0xff]
        %v861 = vld [vmem:[%s465 + $0x30] sm:$0xff]
        %v862 = vld [vmem:[%s465 + $0x38] sm:$0xff]
        %v863 = vld [vmem:[%s465 + $0x40] sm:$0xff]
        %v864 = vld [vmem:[%s465 + $0x48] sm:$0xff]
        %v865 = vld [vmem:[%s465 + $0x50] sm:$0xff]
        %v866 = vld [vmem:[%s465 + $0x58] sm:$0xff]
        %868 = vset.pattern.permute.xlu0 0
        %869 = vperm.xlu0 %868, %v855
        %v870 = vpop.permute.xlu0 %869
        %873 = vset.pattern.permute.xlu0 0
        %874 = vperm.xlu0 %873, %v856
        %v875 = vpop.permute.xlu0 %874
        %878 = vset.pattern.permute.xlu0 0
        %879 = vperm.xlu0 %878, %v857
        %v880 = vpop.permute.xlu0 %879
        %883 = vset.pattern.permute.xlu0 0
        %884 = vperm.xlu0 %883, %v858
        %v885 = vpop.permute.xlu0 %884
        %888 = vset.pattern.permute.xlu0 0
        %889 = vperm.xlu0 %888, %v859
        %v890 = vpop.permute.xlu0 %889
        %893 = vset.pattern.permute.xlu0 0
        %894 = vperm.xlu0 %893, %v860
        %v895 = vpop.permute.xlu0 %894
        %898 = vset.pattern.permute.xlu0 0
        %899 = vperm.xlu0 %898, %v861
        %v900 = vpop.permute.xlu0 %899
        %903 = vset.pattern.permute.xlu0 0
        %904 = vperm.xlu0 %903, %v862
        %v905 = vpop.permute.xlu0 %904
        %908 = vset.pattern.permute.xlu0 0
        %909 = vperm.xlu0 %908, %v863
        %v910 = vpop.permute.xlu0 %909
        %913 = vset.pattern.permute.xlu0 0
        %914 = vperm.xlu0 %913, %v864
        %v915 = vpop.permute.xlu0 %914
        %918 = vset.pattern.permute.xlu0 0
        %919 = vperm.xlu0 %918, %v865
        %v920 = vpop.permute.xlu0 %919
        %923 = vset.pattern.permute.xlu0 0
        %924 = vperm.xlu0 %923, %v866
        %v925 = vpop.permute.xlu0 %924
        %v927 = vadd.f32 %v797, %v870
        %v928 = vadd.f32 %v802, %v875
        %v929 = vadd.f32 %v807, %v880
        %v930 = vadd.f32 %v812, %v885
        %v931 = vadd.f32 %v817, %v890
        %v932 = vadd.f32 %v822, %v895
        %v933 = vadd.f32 %v827, %v900
        %v934 = vadd.f32 %v832, %v905
        %v935 = vadd.f32 %v837, %v910
        %v936 = vadd.f32 %v842, %v915
        %v937 = vadd.f32 %v847, %v920
        %v938 = vadd.f32 %v852, %v925
        %v939 = vmax.f32 %v927, 0.0
        %v940 = vmax.f32 %v928, 0.0
        %v941 = vmax.f32 %v929, 0.0
        %v942 = vmax.f32 %v930, 0.0
        %v943 = vmax.f32 %v931, 0.0
        %v944 = vmax.f32 %v932, 0.0
        %v945 = vmax.f32 %v933, 0.0
        %v946 = vmax.f32 %v934, 0.0
        %v947 = vmax.f32 %v935, 0.0
        %v948 = vmax.f32 %v936, 0.0
        %v949 = vmax.f32 %v937, 0.0
        %v950 = vmax.f32 %v938, 0.0
        %v951 = vld [vmem:[%s470] sm:$0xff]
        %v952 = vld [vmem:[%s470 + $0x8] sm:$0xff]
        %v953 = vld [vmem:[%s470 + $0x10] sm:$0xff]
        %v954 = vld [vmem:[%s470 + $0x18] sm:$0xff]
        %v955 = vld [vmem:[%s470 + $0x20] sm:$0xff]
        %v956 = vld [vmem:[%s470 + $0x28] sm:$0xff]
        %v957 = vld [vmem:[%s470 + $0x30] sm:$0xff]
        %v958 = vld [vmem:[%s470 + $0x38] sm:$0xff]
        %v959 = vld [vmem:[%s470 + $0x40] sm:$0xff]
        %v960 = vld [vmem:[%s470 + $0x48] sm:$0xff]
        %v961 = vld [vmem:[%s470 + $0x50] sm:$0xff]
        %v962 = vld [vmem:[%s470 + $0x58] sm:$0xff]
        %v963 = vld [vmem:[%s470 + $0x60] sm:$0xff]
        %v964 = vld [vmem:[%s470 + $0x68] sm:$0xff]
        %v965 = vld [vmem:[%s470 + $0x70] sm:$0xff]
        %v966 = vld [vmem:[%s470 + $0x78] sm:$0xff]
        %v967 = vld [vmem:[%s470 + $0x80] sm:$0xff]
        %v968 = vld [vmem:[%s470 + $0x88] sm:$0xff]
        %v969 = vld [vmem:[%s470 + $0x90] sm:$0xff]
        %v970 = vld [vmem:[%s470 + $0x98] sm:$0xff]
        %v971 = vld [vmem:[%s470 + $0xa0] sm:$0xff]
        %v972 = vld [vmem:[%s470 + $0xa8] sm:$0xff]
        %v973 = vld [vmem:[%s470 + $0xb0] sm:$0xff]
        %v974 = vld [vmem:[%s470 + $0xb8] sm:$0xff]
        %987 = vrot.lane.b32.xlu0 %v939, 2
        %v988 = vpop.permute.xlu0 %987
        %989 = vrot.lane.b32.xlu0 %v940, 2
        %v990 = vpop.permute.xlu0 %989
        %991 = vrot.lane.b32.xlu0 %v941, 2
        %v992 = vpop.permute.xlu0 %991
        %993 = vrot.lane.b32.xlu0 %v942, 2
        %v994 = vpop.permute.xlu0 %993
        %995 = vrot.lane.b32.xlu0 %v943, 2
        %v996 = vpop.permute.xlu0 %995
        %997 = vrot.lane.b32.xlu0 %v944, 2
        %v998 = vpop.permute.xlu0 %997
        %999 = vrot.lane.b32.xlu0 %v945, 2
        %v1000 = vpop.permute.xlu0 %999
        %1001 = vrot.lane.b32.xlu0 %v946, 2
        %v1002 = vpop.permute.xlu0 %1001
        %1003 = vrot.lane.b32.xlu0 %v947, 2
        %v1004 = vpop.permute.xlu0 %1003
        %1005 = vrot.lane.b32.xlu0 %v948, 2
        %v1006 = vpop.permute.xlu0 %1005
        %1007 = vrot.lane.b32.xlu0 %v949, 2
        %v1008 = vpop.permute.xlu0 %1007
        %1009 = vrot.lane.b32.xlu0 %v950, 2
        %v1010 = vpop.permute.xlu0 %1009
        %vm1023 = vcmask 15360
        %v1024 = vsel %vm1023, 0.0, %v988
        %v1025 = vsel %vm1023, 0.0, %v990
        %v1026 = vsel %vm1023, 0.0, %v992
        %v1027 = vsel %vm1023, 0.0, %v994
        %v1028 = vsel %vm1023, 0.0, %v996
        %v1029 = vsel %vm1023, 0.0, %v998
        %v1030 = vsel %vm1023, 0.0, %v1000
        %v1031 = vsel %vm1023, 0.0, %v1002
        %v1032 = vsel %vm1023, 0.0, %v1004
        %v1033 = vsel %vm1023, 0.0, %v1006
        %v1034 = vsel %vm1023, 0.0, %v1008
        %v1035 = vsel %vm1023, 0.0, %v1010
        %vm1036 = vcmp.ge.s32.totalorder %v503, 2
        %v1037 = vsel %vm1036, 1, 0
        %vm1038 = vcmp.eq.s32.totalorder %v1037, 1
        %v1039 = vsel %vm1038, %v1024, 0.0
        %v1040 = vsel %vm1038, %v1025, 0.0
        %v1041 = vsel %vm1038, %v1026, 0.0
        %v1042 = vsel %vm1038, %v1027, 0.0
        %v1043 = vsel %vm1038, %v1028, 0.0
        %v1044 = vsel %vm1038, %v1029, 0.0
        %v1045 = vsel %vm1038, %v1030, 0.0
        %v1046 = vsel %vm1038, %v1031, 0.0
        %v1047 = vsel %vm1038, %v1032, 0.0
        %v1048 = vsel %vm1038, %v1033, 0.0
        %v1049 = vsel %vm1038, %v1034, 0.0
        %v1050 = vsel %vm1038, %v1035, 0.0
        %vm1051 = vcmask 785408
        %v1053 = vsel %vm1051, %v963, 0
        %v1056 = vsel %vm1051, %v964, 0
        %v1059 = vsel %vm1051, %v965, 0
        %v1062 = vsel %vm1051, %v966, 0
        %v1065 = vsel %vm1051, %v967, 0
        %v1068 = vsel %vm1051, %v968, 0
        %v1071 = vsel %vm1051, %v969, 0
        %v1074 = vsel %vm1051, %v970, 0
        %v1077 = vsel %vm1051, %v971, 0
        %v1080 = vsel %vm1051, %v972, 0
        %v1083 = vsel %vm1051, %v973, 0
        %v1086 = vsel %vm1051, %v974, 0
        %1088 = vmatprep.subr.mxu0 0.0
        %1089 = vmatpush1.msra.mxu0 0.0
        %1090 = vmatprep.subr.mxu0 0.0
        %1091 = vmatpush1.msra.mxu0 0.0
        %1092 = vmatprep.subr.mxu0 0.0
        %1093 = vmatpush1.msra.mxu0 0.0
        %1094 = vmatprep.subr.mxu0 0.0
        %1095 = vmatpush1.msra.mxu0 0.0
        %1096 = vmatprep.subr.mxu0 0.0
        %1097 = vmatpush1.msra.mxu0 %v950
        %1098 = vmatprep.subr.mxu0 0.0
        %1099 = vmatpush1.msra.mxu0 %v949
        %1100 = vmatprep.subr.mxu0 0.0
        %1101 = vmatpush1.msra.mxu0 %v948
        %1102 = vmatprep.subr.mxu0 0.0
        %1103 = vmatpush1.msra.mxu0 %v947
        %1104 = vmatprep.subr.mxu0 0.0
        %1105 = vmatpush1.msra.mxu0 %v946
        %1106 = vmatprep.subr.mxu0 0.0
        %1107 = vmatpush1.msra.mxu0 %v945
        %1108 = vmatprep.subr.mxu0 0.0
        %1109 = vmatpush1.msra.mxu0 %v944
        %1110 = vmatprep.subr.mxu0 0.0
        %1111 = vmatpush1.msra.mxu0 %v943
        %1112 = vmatprep.subr.mxu0 0.0
        %1113 = vmatpush1.msra.mxu0 %v942
        %1114 = vmatprep.subr.mxu0 0.0
        %1115 = vmatpush1.msra.mxu0 %v941
        %1116 = vmatprep.subr.mxu0 0.0
        %1117 = vmatpush1.msra.mxu0 %v940
        %1118 = vmatprep.subr.mxu0 0.0
        %1119 = vmatpush1.msra.mxu0 %v939
        %1120 = vmatprep.subr.mxu0 0.0
        %1121 = vmatpush2.msra.mxu0 0.0
        %1122 = vmatprep.subr.mxu0 0.0
        %1123 = vmatpush2.msra.mxu0 0.0
        %1124 = vmatprep.subr.mxu0 0.0
        %1125 = vmatpush2.msra.mxu0 0.0
        %1126 = vmatprep.subr.mxu0 0.0
        %1127 = vmatpush2.msra.mxu0 0.0
        %1128 = vmatprep.subr.mxu0 0.0
        %1129 = vmatpush2.msra.mxu0 0.0
        %1130 = vmatprep.subr.mxu0 0.0
        %1131 = vmatpush2.msra.mxu0 0.0
        %1132 = vmatprep.subr.mxu0 0.0
        %1133 = vmatpush2.msra.mxu0 0.0
        %1134 = vmatprep.subr.mxu0 0.0
        %1135 = vmatpush2.msra.mxu0 0.0
        %1136 = vmatprep.subr.mxu0 0.0
        %1137 = vmatpush2.msra.mxu0 0.0
        %1138 = vmatprep.subr.mxu0 0.0
        %1139 = vmatpush2.msra.mxu0 0.0
        %1140 = vmatprep.subr.mxu0 0.0
        %1141 = vmatpush2.msra.mxu0 0.0
        %1142 = vmatprep.subr.mxu0 0.0
        %1143 = vmatpush2.msra.mxu0 0.0
        %1144 = vmatprep.subr.mxu0 0.0
        %1145 = vmatpush2.msra.mxu0 0.0
        %1146 = vmatprep.subr.mxu0 0.0
        %1147 = vmatpush2.msra.mxu0 0.0
        %1148 = vmatprep.subr.mxu0 0.0
        %1149 = vmatpush2.msra.mxu0 0.0
        %1150 = vmatprep.subr.mxu0 0.0
        %1151 = vmatpush2.msra.mxu0 0.0
        %1152 = vmatprep.mubr.f32.mxu0 0.0
        %1153 = vmatmul.mubr.f32.gmra.mxu0 %v1053
        %v1154 = vpop.f32.mrf.mxu0
        %v1155 = vadd.f32 0.0, %v1154
        %v1156 = vpop.f32.mrf.mxu0
        %1157 = vmatprep.mubr.f32.mxu0 0.0
        %1158 = vmatmul.mubr.f32.gmra.mxu0 %v1056
        %v1159 = vpop.f32.mrf.mxu0
        %v1160 = vadd.f32 0.0, %v1159
        %v1161 = vpop.f32.mrf.mxu0
        %1162 = vmatprep.mubr.f32.mxu0 0.0
        %1163 = vmatmul.mubr.f32.gmra.mxu0 %v1059
        %v1164 = vpop.f32.mrf.mxu0
        %v1165 = vadd.f32 0.0, %v1164
        %v1166 = vpop.f32.mrf.mxu0
        %1167 = vmatprep.mubr.f32.mxu0 0.0
        %1168 = vmatmul.mubr.f32.gmra.mxu0 %v1062
        %v1169 = vpop.f32.mrf.mxu0
        %v1170 = vadd.f32 0.0, %v1169
        %v1171 = vpop.f32.mrf.mxu0
        %1172 = vmatprep.mubr.f32.mxu0 0.0
        %1173 = vmatmul.mubr.f32.gmra.mxu0 %v1065
        %v1174 = vpop.f32.mrf.mxu0
        %v1175 = vadd.f32 0.0, %v1174
        %v1176 = vpop.f32.mrf.mxu0
        %1177 = vmatprep.mubr.f32.mxu0 0.0
        %1178 = vmatmul.mubr.f32.gmra.mxu0 %v1068
        %v1179 = vpop.f32.mrf.mxu0
        %v1180 = vadd.f32 0.0, %v1179
        %v1181 = vpop.f32.mrf.mxu0
        %1182 = vmatprep.mubr.f32.mxu0 0.0
        %1183 = vmatmul.mubr.f32.gmra.mxu0 %v1071
        %v1184 = vpop.f32.mrf.mxu0
        %v1185 = vadd.f32 0.0, %v1184
        %v1186 = vpop.f32.mrf.mxu0
        %1187 = vmatprep.mubr.f32.mxu0 0.0
        %1188 = vmatmul.mubr.f32.gmra.mxu0 %v1074
        %v1189 = vpop.f32.mrf.mxu0
        %v1190 = vadd.f32 0.0, %v1189
        %v1191 = vpop.f32.mrf.mxu0
        %1192 = vmatprep.mubr.f32.mxu0 0.0
        %1193 = vmatmul.mubr.f32.gmra.mxu0 %v1077
        %v1194 = vpop.f32.mrf.mxu0
        %v1195 = vadd.f32 0.0, %v1194
        %v1196 = vpop.f32.mrf.mxu0
        %1197 = vmatprep.mubr.f32.mxu0 0.0
        %1198 = vmatmul.mubr.f32.gmra.mxu0 %v1080
        %v1199 = vpop.f32.mrf.mxu0
        %v1200 = vadd.f32 0.0, %v1199
        %v1201 = vpop.f32.mrf.mxu0
        %1202 = vmatprep.mubr.f32.mxu0 0.0
        %1203 = vmatmul.mubr.f32.gmra.mxu0 %v1083
        %v1204 = vpop.f32.mrf.mxu0
        %v1205 = vadd.f32 0.0, %v1204
        %v1206 = vpop.f32.mrf.mxu0
        %1207 = vmatprep.mubr.f32.mxu0 0.0
        %1208 = vmatmul.mubr.f32.gmra.mxu0 %v1086
        %v1209 = vpop.f32.mrf.mxu0
        %v1210 = vadd.f32 0.0, %v1209
        %v1211 = vpop.f32.mrf.mxu0
        %1212 = vdwg.mxu0
        %v1214 = vsel %vm1051, %v951, 0
        %v1217 = vsel %vm1051, %v952, 0
        %v1220 = vsel %vm1051, %v953, 0
        %v1223 = vsel %vm1051, %v954, 0
        %v1226 = vsel %vm1051, %v955, 0
        %v1229 = vsel %vm1051, %v956, 0
        %v1232 = vsel %vm1051, %v957, 0
        %v1235 = vsel %vm1051, %v958, 0
        %v1238 = vsel %vm1051, %v959, 0
        %v1241 = vsel %vm1051, %v960, 0
        %v1244 = vsel %vm1051, %v961, 0
        %v1247 = vsel %vm1051, %v962, 0
        %1249 = vmatprep.subr.mxu0 0.0
        %1250 = vmatpush1.msra.mxu0 0.0
        %1251 = vmatprep.subr.mxu0 0.0
        %1252 = vmatpush1.msra.mxu0 0.0
        %1253 = vmatprep.subr.mxu0 0.0
        %1254 = vmatpush1.msra.mxu0 0.0
        %1255 = vmatprep.subr.mxu0 0.0
        %1256 = vmatpush1.msra.mxu0 0.0
        %1257 = vmatprep.subr.mxu0 0.0
        %1258 = vmatpush1.msra.mxu0 %v1050
        %1259 = vmatprep.subr.mxu0 0.0
        %1260 = vmatpush1.msra.mxu0 %v1049
        %1261 = vmatprep.subr.mxu0 0.0
        %1262 = vmatpush1.msra.mxu0 %v1048
        %1263 = vmatprep.subr.mxu0 0.0
        %1264 = vmatpush1.msra.mxu0 %v1047
        %1265 = vmatprep.subr.mxu0 0.0
        %1266 = vmatpush1.msra.mxu0 %v1046
        %1267 = vmatprep.subr.mxu0 0.0
        %1268 = vmatpush1.msra.mxu0 %v1045
        %1269 = vmatprep.subr.mxu0 0.0
        %1270 = vmatpush1.msra.mxu0 %v1044
        %1271 = vmatprep.subr.mxu0 0.0
        %1272 = vmatpush1.msra.mxu0 %v1043
        %1273 = vmatprep.subr.mxu0 0.0
        %1274 = vmatpush1.msra.mxu0 %v1042
        %1275 = vmatprep.subr.mxu0 0.0
        %1276 = vmatpush1.msra.mxu0 %v1041
        %1277 = vmatprep.subr.mxu0 0.0
        %1278 = vmatpush1.msra.mxu0 %v1040
        %1279 = vmatprep.subr.mxu0 0.0
        %1280 = vmatpush1.msra.mxu0 %v1039
        %1281 = vmatprep.subr.mxu0 0.0
        %1282 = vmatpush2.msra.mxu0 0.0
        %1283 = vmatprep.subr.mxu0 0.0
        %1284 = vmatpush2.msra.mxu0 0.0
        %1285 = vmatprep.subr.mxu0 0.0
        %1286 = vmatpush2.msra.mxu0 0.0
        %1287 = vmatprep.subr.mxu0 0.0
        %1288 = vmatpush2.msra.mxu0 0.0
        %1289 = vmatprep.subr.mxu0 0.0
        %1290 = vmatpush2.msra.mxu0 0.0
        %1291 = vmatprep.subr.mxu0 0.0
        %1292 = vmatpush2.msra.mxu0 0.0
        %1293 = vmatprep.subr.mxu0 0.0
        %1294 = vmatpush2.msra.mxu0 0.0
        %1295 = vmatprep.subr.mxu0 0.0
        %1296 = vmatpush2.msra.mxu0 0.0
        %1297 = vmatprep.subr.mxu0 0.0
        %1298 = vmatpush2.msra.mxu0 0.0
        %1299 = vmatprep.subr.mxu0 0.0
        %1300 = vmatpush2.msra.mxu0 0.0
        %1301 = vmatprep.subr.mxu0 0.0
        %1302 = vmatpush2.msra.mxu0 0.0
        %1303 = vmatprep.subr.mxu0 0.0
        %1304 = vmatpush2.msra.mxu0 0.0
        %1305 = vmatprep.subr.mxu0 0.0
        %1306 = vmatpush2.msra.mxu0 0.0
        %1307 = vmatprep.subr.mxu0 0.0
        %1308 = vmatpush2.msra.mxu0 0.0
        %1309 = vmatprep.subr.mxu0 0.0
        %1310 = vmatpush2.msra.mxu0 0.0
        %1311 = vmatprep.subr.mxu0 0.0
        %1312 = vmatpush2.msra.mxu0 0.0
        %1313 = vmatprep.mubr.f32.mxu0 0.0
        %1314 = vmatmul.mubr.f32.gmra.mxu0 %v1214
        %v1315 = vpop.f32.mrf.mxu0
        %v1316 = vadd.f32 %v1155, %v1315
        %v1317 = vpop.f32.mrf.mxu0
        %1318 = vmatprep.mubr.f32.mxu0 0.0
        %1319 = vmatmul.mubr.f32.gmra.mxu0 %v1217
        %v1320 = vpop.f32.mrf.mxu0
        %v1321 = vadd.f32 %v1160, %v1320
        %v1322 = vpop.f32.mrf.mxu0
        %1323 = vmatprep.mubr.f32.mxu0 0.0
        %1324 = vmatmul.mubr.f32.gmra.mxu0 %v1220
        %v1325 = vpop.f32.mrf.mxu0
        %v1326 = vadd.f32 %v1165, %v1325
        %v1327 = vpop.f32.mrf.mxu0
        %1328 = vmatprep.mubr.f32.mxu0 0.0
        %1329 = vmatmul.mubr.f32.gmra.mxu0 %v1223
        %v1330 = vpop.f32.mrf.mxu0
        %v1331 = vadd.f32 %v1170, %v1330
        %v1332 = vpop.f32.mrf.mxu0
        %1333 = vmatprep.mubr.f32.mxu0 0.0
        %1334 = vmatmul.mubr.f32.gmra.mxu0 %v1226
        %v1335 = vpop.f32.mrf.mxu0
        %v1336 = vadd.f32 %v1175, %v1335
        %v1337 = vpop.f32.mrf.mxu0
        %1338 = vmatprep.mubr.f32.mxu0 0.0
        %1339 = vmatmul.mubr.f32.gmra.mxu0 %v1229
        %v1340 = vpop.f32.mrf.mxu0
        %v1341 = vadd.f32 %v1180, %v1340
        %v1342 = vpop.f32.mrf.mxu0
        %1343 = vmatprep.mubr.f32.mxu0 0.0
        %1344 = vmatmul.mubr.f32.gmra.mxu0 %v1232
        %v1345 = vpop.f32.mrf.mxu0
        %v1346 = vadd.f32 %v1185, %v1345
        %v1347 = vpop.f32.mrf.mxu0
        %1348 = vmatprep.mubr.f32.mxu0 0.0
        %1349 = vmatmul.mubr.f32.gmra.mxu0 %v1235
        %v1350 = vpop.f32.mrf.mxu0
        %v1351 = vadd.f32 %v1190, %v1350
        %v1352 = vpop.f32.mrf.mxu0
        %1353 = vmatprep.mubr.f32.mxu0 0.0
        %1354 = vmatmul.mubr.f32.gmra.mxu0 %v1238
        %v1355 = vpop.f32.mrf.mxu0
        %v1356 = vadd.f32 %v1195, %v1355
        %v1357 = vpop.f32.mrf.mxu0
        %1358 = vmatprep.mubr.f32.mxu0 0.0
        %1359 = vmatmul.mubr.f32.gmra.mxu0 %v1241
        %v1360 = vpop.f32.mrf.mxu0
        %v1361 = vadd.f32 %v1200, %v1360
        %v1362 = vpop.f32.mrf.mxu0
        %1363 = vmatprep.mubr.f32.mxu0 0.0
        %1364 = vmatmul.mubr.f32.gmra.mxu0 %v1244
        %v1365 = vpop.f32.mrf.mxu0
        %v1366 = vadd.f32 %v1205, %v1365
        %v1367 = vpop.f32.mrf.mxu0
        %1368 = vmatprep.mubr.f32.mxu0 0.0
        %1369 = vmatmul.mubr.f32.gmra.mxu0 %v1247
        %v1370 = vpop.f32.mrf.mxu0
        %v1371 = vadd.f32 %v1210, %v1370
        %v1372 = vpop.f32.mrf.mxu0
        %1373 = vdwg.mxu0
        %v1374 = vld [vmem:[%s475] sm:$0xff]
        %v1375 = vld [vmem:[%s475 + $0x8] sm:$0xff]
        %v1376 = vld [vmem:[%s475 + $0x10] sm:$0xff]
        %v1377 = vld [vmem:[%s475 + $0x18] sm:$0xff]
        %v1378 = vld [vmem:[%s475 + $0x20] sm:$0xff]
        %v1379 = vld [vmem:[%s475 + $0x28] sm:$0xff]
        %v1380 = vld [vmem:[%s475 + $0x30] sm:$0xff]
        %v1381 = vld [vmem:[%s475 + $0x38] sm:$0xff]
        %v1382 = vld [vmem:[%s475 + $0x40] sm:$0xff]
        %v1383 = vld [vmem:[%s475 + $0x48] sm:$0xff]
        %v1384 = vld [vmem:[%s475 + $0x50] sm:$0xff]
        %v1385 = vld [vmem:[%s475 + $0x58] sm:$0xff]
        %1387 = vset.pattern.permute.xlu0 0
        %1388 = vperm.xlu0 %1387, %v1374
        %v1389 = vpop.permute.xlu0 %1388
        %1392 = vset.pattern.permute.xlu0 0
        %1393 = vperm.xlu0 %1392, %v1375
        %v1394 = vpop.permute.xlu0 %1393
        %1397 = vset.pattern.permute.xlu0 0
        %1398 = vperm.xlu0 %1397, %v1376
        %v1399 = vpop.permute.xlu0 %1398
        %1402 = vset.pattern.permute.xlu0 0
        %1403 = vperm.xlu0 %1402, %v1377
        %v1404 = vpop.permute.xlu0 %1403
        %1407 = vset.pattern.permute.xlu0 0
        %1408 = vperm.xlu0 %1407, %v1378
        %v1409 = vpop.permute.xlu0 %1408
        %1412 = vset.pattern.permute.xlu0 0
        %1413 = vperm.xlu0 %1412, %v1379
        %v1414 = vpop.permute.xlu0 %1413
        %1417 = vset.pattern.permute.xlu0 0
        %1418 = vperm.xlu0 %1417, %v1380
        %v1419 = vpop.permute.xlu0 %1418
        %1422 = vset.pattern.permute.xlu0 0
        %1423 = vperm.xlu0 %1422, %v1381
        %v1424 = vpop.permute.xlu0 %1423
        %1427 = vset.pattern.permute.xlu0 0
        %1428 = vperm.xlu0 %1427, %v1382
        %v1429 = vpop.permute.xlu0 %1428
        %1432 = vset.pattern.permute.xlu0 0
        %1433 = vperm.xlu0 %1432, %v1383
        %v1434 = vpop.permute.xlu0 %1433
        %1437 = vset.pattern.permute.xlu0 0
        %1438 = vperm.xlu0 %1437, %v1384
        %v1439 = vpop.permute.xlu0 %1438
        %1442 = vset.pattern.permute.xlu0 0
        %1443 = vperm.xlu0 %1442, %v1385
        %v1444 = vpop.permute.xlu0 %1443
        %v1446 = vadd.f32 %v1316, %v1389
        %v1447 = vadd.f32 %v1321, %v1394
        %v1448 = vadd.f32 %v1326, %v1399
        %v1449 = vadd.f32 %v1331, %v1404
        %v1450 = vadd.f32 %v1336, %v1409
        %v1451 = vadd.f32 %v1341, %v1414
        %v1452 = vadd.f32 %v1346, %v1419
        %v1453 = vadd.f32 %v1351, %v1424
        %v1454 = vadd.f32 %v1356, %v1429
        %v1455 = vadd.f32 %v1361, %v1434
        %v1456 = vadd.f32 %v1366, %v1439
        %v1457 = vadd.f32 %v1371, %v1444
        %v1458 = vmax.f32 %v1446, 0.0
        %v1459 = vmax.f32 %v1447, 0.0
        %v1460 = vmax.f32 %v1448, 0.0
        %v1461 = vmax.f32 %v1449, 0.0
        %v1462 = vmax.f32 %v1450, 0.0
        %v1463 = vmax.f32 %v1451, 0.0
        %v1464 = vmax.f32 %v1452, 0.0
        %v1465 = vmax.f32 %v1453, 0.0
        %v1466 = vmax.f32 %v1454, 0.0
        %v1467 = vmax.f32 %v1455, 0.0
        %v1468 = vmax.f32 %v1456, 0.0
        %v1469 = vmax.f32 %v1457, 0.0
        %v1470 = vld [vmem:[%s480] sm:$0xff]
        %v1471 = vld [vmem:[%s480 + $0x8] sm:$0xff]
        %v1472 = vld [vmem:[%s480 + $0x10] sm:$0x3]
        %v1473 = vld [vmem:[%s485] sm:$0xff]
        %v1474 = vld [vmem:[%s485 + $0x8] sm:$0xff]
        %v1475 = vld [vmem:[%s485 + $0x10] sm:$0x3]
        %1477 = vset.pattern.permute.xlu0 0
        %1478 = vperm.xlu0 %1477, %v1473
        %v1479 = vpop.permute.xlu0 %1478
        %1482 = vset.pattern.permute.xlu0 0
        %1483 = vperm.xlu0 %1482, %v1474
        %v1484 = vpop.permute.xlu0 %1483
        %1487 = vset.pattern.permute.xlu0 0
        %1488 = vperm.xlu0 %1487, %v1475
        %v1489 = vpop.permute.xlu0 %1488
        %v1492 = vsel %vm1051, %v1470, 0
        %v1495 = vsel %vm1051, %v1471, 0
        %v1498 = vsel %vm1051, %v1472, 0
        %1500 = vmatprep.subr.mxu0 0.0
        %1501 = vmatpush1.msra.mxu0 0.0
        %1502 = vmatprep.subr.mxu0 0.0
        %1503 = vmatpush1.msra.mxu0 0.0
        %1504 = vmatprep.subr.mxu0 0.0
        %1505 = vmatpush1.msra.mxu0 0.0
        %1506 = vmatprep.subr.mxu0 0.0
        %1507 = vmatpush1.msra.mxu0 0.0
        %1508 = vmatprep.subr.mxu0 0.0
        %1509 = vmatpush1.msra.mxu0 %v1469
        %1510 = vmatprep.subr.mxu0 0.0
        %1511 = vmatpush1.msra.mxu0 %v1468
        %1512 = vmatprep.subr.mxu0 0.0
        %1513 = vmatpush1.msra.mxu0 %v1467
        %1514 = vmatprep.subr.mxu0 0.0
        %1515 = vmatpush1.msra.mxu0 %v1466
        %1516 = vmatprep.subr.mxu0 0.0
        %1517 = vmatpush1.msra.mxu0 %v1465
        %1518 = vmatprep.subr.mxu0 0.0
        %1519 = vmatpush1.msra.mxu0 %v1464
        %1520 = vmatprep.subr.mxu0 0.0
        %1521 = vmatpush1.msra.mxu0 %v1463
        %1522 = vmatprep.subr.mxu0 0.0
        %1523 = vmatpush1.msra.mxu0 %v1462
        %1524 = vmatprep.subr.mxu0 0.0
        %1525 = vmatpush1.msra.mxu0 %v1461
        %1526 = vmatprep.subr.mxu0 0.0
        %1527 = vmatpush1.msra.mxu0 %v1460
        %1528 = vmatprep.subr.mxu0 0.0
        %1529 = vmatpush1.msra.mxu0 %v1459
        %1530 = vmatprep.subr.mxu0 0.0
        %1531 = vmatpush1.msra.mxu0 %v1458
        %1532 = vmatprep.subr.mxu0 0.0
        %1533 = vmatpush2.msra.mxu0 0.0
        %1534 = vmatprep.subr.mxu0 0.0
        %1535 = vmatpush2.msra.mxu0 0.0
        %1536 = vmatprep.subr.mxu0 0.0
        %1537 = vmatpush2.msra.mxu0 0.0
        %1538 = vmatprep.subr.mxu0 0.0
        %1539 = vmatpush2.msra.mxu0 0.0
        %1540 = vmatprep.subr.mxu0 0.0
        %1541 = vmatpush2.msra.mxu0 0.0
        %1542 = vmatprep.subr.mxu0 0.0
        %1543 = vmatpush2.msra.mxu0 0.0
        %1544 = vmatprep.subr.mxu0 0.0
        %1545 = vmatpush2.msra.mxu0 0.0
        %1546 = vmatprep.subr.mxu0 0.0
        %1547 = vmatpush2.msra.mxu0 0.0
        %1548 = vmatprep.subr.mxu0 0.0
        %1549 = vmatpush2.msra.mxu0 0.0
        %1550 = vmatprep.subr.mxu0 0.0
        %1551 = vmatpush2.msra.mxu0 0.0
        %1552 = vmatprep.subr.mxu0 0.0
        %1553 = vmatpush2.msra.mxu0 0.0
        %1554 = vmatprep.subr.mxu0 0.0
        %1555 = vmatpush2.msra.mxu0 0.0
        %1556 = vmatprep.subr.mxu0 0.0
        %1557 = vmatpush2.msra.mxu0 0.0
        %1558 = vmatprep.subr.mxu0 0.0
        %1559 = vmatpush2.msra.mxu0 0.0
        %1560 = vmatprep.subr.mxu0 0.0
        %1561 = vmatpush2.msra.mxu0 0.0
        %1562 = vmatprep.subr.mxu0 0.0
        %1563 = vmatpush2.msra.mxu0 0.0
        %1564 = vmatprep.mubr.f32.mxu0 0.0
        %1565 = vmatmul.mubr.f32.gmra.mxu0 %v1492
        %v1566 = vpop.f32.mrf.mxu0
        %v1567 = vadd.f32 %v1479, %v1566
        %v1568 = vpop.f32.mrf.mxu0
        %1569 = vmatprep.mubr.f32.mxu0 0.0
        %1570 = vmatmul.mubr.f32.gmra.mxu0 %v1495
        %v1571 = vpop.f32.mrf.mxu0
        %v1572 = vadd.f32 %v1484, %v1571
        %v1573 = vpop.f32.mrf.mxu0
        %1574 = vmatprep.mubr.f32.mxu0 0.0
        %1575 = vmatmul.mubr.f32.gmra.mxu0 %v1498
        %v1576 = vpop.f32.mrf.mxu0
        %v1577 = vadd.f32 %v1489, %v1576
        %v1578 = vpop.f32.mrf.mxu0
        %1579 = vdwg.mxu0
        %vm1580 = vcmp.gt.f32.partialorder %v1567, 20.0
        %v1581 = vmin.f32 %v1567, 20.0
        %v1582 = vmul.f32 %v1581, 1.442695
        %v1583 = vpow.pop %v1582
        %v1584 = vadd.f32 %v1583, 1.0
        %v1585 = vlog2.pop %v1584
        %v1586 = vmul.f32 %v1585, 0.6931472
        %v1587 = vmul.f32 -0.5, %v1583
        %v1588 = vadd.f32 %v1587, 1.0
        %v1589 = vmul.f32 %v1588, %v1583
        %v1590 = vand.u32 2147483647, %v1583
        %vm1591 = vcmp.lt.f32.partialorder %v1590, 0.0004427343
        %v1592 = vsel %vm1591, %v1589, %v1586
        %v1593 = vsel %vm1580, %v1567, %v1592
        %v1594 = vand.u32 2147483647, %v1567
        %vm1595 = vcmask 1042432
        %v1596 = vsel %vm1595, %v1594, 0.0
        %v1597 = vrot.slane %v1596, 4
        %v1598 = vadd.f32 %v1596, %v1597
        %v1599 = vrot.slane %v1598, 2
        %v1600 = vadd.f32 %v1598, %v1599
        %v1601 = vrot.slane %v1600, 1
        %v1602 = vadd.f32 %v1600, %v1601
        %vm1603 = vcmp.gt.f32.partialorder %v1572, 20.0
        %v1604 = vmin.f32 %v1572, 20.0
        %v1605 = vmul.f32 %v1604, 1.442695
        %v1606 = vpow.pop %v1605
        %v1607 = vadd.f32 %v1606, 1.0
        %v1608 = vlog2.pop %v1607
        %v1609 = vmul.f32 %v1608, 0.6931472
        %v1610 = vmul.f32 -0.5, %v1606
        %v1611 = vadd.f32 %v1610, 1.0
        %v1612 = vmul.f32 %v1611, %v1606
        %v1613 = vand.u32 2147483647, %v1606
        %vm1614 = vcmp.lt.f32.partialorder %v1613, 0.0004427343
        %v1615 = vsel %vm1614, %v1612, %v1609
        %v1616 = vsel %vm1603, %v1572, %v1615
        %vm1619 = vcmask 1041408
        %v1620 = vrot.slane %v1567, 6
        %v1621 = vrot.slane %v1572, 6
        %v1622 = vsel %vm1619, %v1620, %v1621
        %v1624 = vadd.f32 %v1567, %v1622
        %v1626 = vrot.slane %v1616, 6
        %v1628 = vadd.f32 %v1593, %v1626
        %v1629 = vand.u32 2147483647, %v1572
        %v1632 = vrot.slane %v1594, 6
        %v1633 = vrot.slane %v1629, 6
        %v1634 = vsel %vm1619, %v1632, %v1633
        %v1636 = vsel %vm1595, %v1634, 0.0
        %v1637 = vrot.slane %v1636, 4
        %v1638 = vadd.f32 %v1636, %v1637
        %v1639 = vrot.slane %v1638, 2
        %v1640 = vadd.f32 %v1638, %v1639
        %v1641 = vrot.slane %v1640, 1
        %v1642 = vadd.f32 %v1640, %v1641
        %v1643 = vadd.f32 %v1602, %v1642
        %vm1644 = vcmp.gt.f32.partialorder %v1577, 20.0
        %v1645 = vmin.f32 %v1577, 20.0
        %v1646 = vmul.f32 %v1645, 1.442695
        %v1647 = vpow.pop %v1646
        %v1648 = vadd.f32 %v1647, 1.0
        %v1649 = vlog2.pop %v1648
        %v1650 = vmul.f32 %v1649, 0.6931472
        %v1651 = vmul.f32 -0.5, %v1647
        %v1652 = vadd.f32 %v1651, 1.0
        %v1653 = vmul.f32 %v1652, %v1647
        %v1654 = vand.u32 2147483647, %v1647
        %vm1655 = vcmp.lt.f32.partialorder %v1654, 0.0004427343
        %v1656 = vsel %vm1655, %v1653, %v1650
        %v1657 = vsel %vm1644, %v1577, %v1656
        %v1658 = vrot.slane %v1572, 4
        %v1660 = vadd.f32 %v1624, %v1658
        %vm1662 = vcmask 1043456
        %v1663 = vrot.slane %v1616, 4
        %v1664 = vrot.slane %v1657, 4
        %v1665 = vsel %vm1662, %v1663, %v1664
        %v1667 = vadd.f32 %v1628, %v1665
        %v1668 = vrot.slane %v1629, 4
        %v1670 = vsel %vm1595, %v1668, 0.0
        %v1671 = vrot.slane %v1670, 4
        %v1672 = vadd.f32 %v1670, %v1671
        %v1673 = vrot.slane %v1672, 2
        %v1674 = vadd.f32 %v1672, %v1673
        %v1675 = vrot.slane %v1674, 1
        %v1676 = vadd.f32 %v1674, %v1675
        %v1677 = vadd.f32 %v1643, %v1676
        %v1678 = vld [vmem:[%s489] sm:$0x7]
        %1680 = vset.pattern.permute.xlu0 0
        %1681 = vperm.xlu0 %1680, %v1678
        %v1682 = vpop.permute.xlu0 %1681
        %v1684 = vadd.f32 %v1660, %v1682
        %v1685 = vmax.f32 %v1667, 1e-30
        %s1686 = scalar_lea.vmem %s455, 16
        %v1687 = vld [vmem:[%s1686] sm:$0xff]
        %v1688 = vsub.f32 %v1687, %v1684
        %v1689 = vmul.f32 %v1688, %v1688
        %v1690 = vlog2.pop %v1685
        %v1691 = vmul.f32 %v1690, 0.6931472
        %v1693 = vrot.slane %v1685, 3
        %v1695 = vrcp.pop %v1693
        %v1696 = vmul.f32 %v1689, %v1695
        %v1698 = vrot.slane %v1696, 5
        %v1700 = vadd.f32 %v1691, %v1698
        %v1701 = vmul.f32 %v1700, 0.5
        %v1702 = vmul.f32 %v1691, 0.5
        %v1703 = vmul.f32 %v1702, 1.442695
        %v1704 = vpow.pop %v1703
        %v1705 = vmul.f32 %v1701, %v1704
        %vm1706 = vcmp.lt.s32.totalorder %v503, 15
        %vm1707 = vmand %vm1706, %vm504
        %v1708 = vsel %vm1707, 1, 0
        %vm1709 = vcmp.eq.s32.totalorder %v1708, 1
        %v1710 = vsel %vm1709, %v1705, 0.0
        %v1711 = vsel %vm504, %v1677, 0.0
        %v1713 = vrot.slane %v1710, 3
        %v1715 = vsel %vm1595, %v1713, 0.0
        %v1716 = vrot.slane %v1715, 4
        %v1717 = vadd.f32 %v1715, %v1716
        %v1718 = vrot.slane %v1717, 2
        %v1719 = vadd.f32 %v1717, %v1718
        %v1720 = vrot.slane %v1719, 1
        %v1721 = vadd.f32 %v1719, %v1720
        %1722 = vst [vmem:[%s445] sm:$0x1] %v1721
        %1723 = vst [vmem:[%s451] sm:$0x1] %v1711
        %s1724 = sand.u32 %s257, 1
        %s1725 = scalar_lea.sflag [#allocation3], %s1724
        %s1726 = sand.u32 %s257, 1
        %s1727 = scalar_lea.vmem [#allocation2], %s1726
        %s1728 = sand.u32 %s285, 1
        %s1729 = scalar_lea.sflag [#allocation5], %s1728
        %s1730 = sand.u32 %s285, 1
        %s1731 = scalar_lea.vmem [#allocation4], %s1730
        // Predicated region
        $region53: #{tpu_custom_call.1} parent=51 // pred_check
          %p1732 = pneg %p267
        $region54: #{tpu_custom_call.1} parent=51 // pred_check_branch
          %1734 = sbr.rel (%p1732) target = $region56
        $region55: #{tpu_custom_call.1} parent=51 // pred_region
          %s1736 = ssub.s32 16, 16
          %1737 = vsyncadd %s1725, %s1736
          %s1738 = sadd.s32 %s32, %s31
          %s1739 = smul.addr %s1738, 16
          %s1740 = scalar_lea.hbm %s8, %s1739
          %s1742 = sshll.u32 %s1727, 4
          %s1743 = int_to_ptr.vmem [resolvable:$true] %s1742
          %1745 = dma.vmem_to_hbm [thread:$0]  %s1743, 16, %s1740, %s1725
        $region56: #{tpu_custom_call.1} parent=51 // pred_fallthru
          _
        // Predicated region
        $region57: #{tpu_custom_call.1} parent=51 // pred_check
          %p1746 = pneg %p295
        $region58: #{tpu_custom_call.1} parent=51 // pred_check_branch
          %1748 = sbr.rel (%p1746) target = $region60
        $region59: #{tpu_custom_call.1} parent=51 // pred_region
          %s1750 = ssub.s32 16, 16
          %1751 = vsyncadd %s1729, %s1750
          %s1752 = sadd.s32 %s32, %s31
          %s1753 = smul.addr %s1752, 16
          %s1754 = scalar_lea.hbm %s9, %s1753
          %s1756 = sshll.u32 %s1731, 4
          %s1757 = int_to_ptr.vmem [resolvable:$true] %s1756
          %1759 = dma.vmem_to_hbm [thread:$0]  %s1757, 16, %s1754, %s1729
        $region60: #{tpu_custom_call.1} parent=51 // pred_fallthru
          _
      $region52: #{tpu_custom_call.1} parent=5 // pred_fallthru
        _
      %p1760 = scmp.le.s32.totalorder 2, %s22
      // Predicated region
      $region61: #{tpu_custom_call.1} parent=5 // pred_check
        %p1761 = pneg %p1760
      $region62: #{tpu_custom_call.1} parent=5 // pred_check_branch
        %1763 = sbr.rel (%p1761) target = $region64
      $region63: #{tpu_custom_call.1} parent=5 // pred_region
        %s1764 = ssub.s32 %s22, 2
        // Predicated region
        $region65: #{tpu_custom_call.1} parent=63 // pred_check
          %p1765 = pneg %p273
        $region66: #{tpu_custom_call.1} parent=63 // pred_check_branch
          %1767 = sbr.rel (%p1765) target = $region68
        $region67: #{tpu_custom_call.1} parent=63 // pred_region
          %s1768 = sand.u32 %s258, 1
          %s1769 = scalar_lea.sflag [#allocation3], %s1768
          %s1770 = sand.u32 %s258, 1
          %s1771 = scalar_lea.vmem [#allocation2], %s1770
          %1772 = dma.done %s1769, 16
        $region68: #{tpu_custom_call.1} parent=63 // pred_fallthru
          _
        // Predicated region
        $region69: #{tpu_custom_call.1} parent=63 // pred_check
          %p1773 = pneg %p301
        $region70: #{tpu_custom_call.1} parent=63 // pred_check_branch
          %1775 = sbr.rel (%p1773) target = $region72
        $region71: #{tpu_custom_call.1} parent=63 // pred_region
          %s1776 = sand.u32 %s286, 1
          %s1777 = scalar_lea.sflag [#allocation5], %s1776
          %s1778 = sand.u32 %s286, 1
          %s1779 = scalar_lea.vmem [#allocation4], %s1778
          %1780 = dma.done %s1777, 16
        $region72: #{tpu_custom_call.1} parent=63 // pred_fallthru
          _
      $region64: #{tpu_custom_call.1} parent=5 // pred_fallthru
        _
    $region6: #{tpu_custom_call.1} parent=1 // loop_footer
      %s26 = sadd.s32 1, %s22
    $region7: #{tpu_custom_call.1} parent=1 // loop_footer_branch
      %21 = sbr.rel target = $region3
    $region8: #{tpu_custom_call.1} parent=1 // loop_exit
      _
    %1781 = vsyncpa [#allocation3], 1
    %s1782 = scalar_lea.sflag [#allocation3], 1
    %1783 = vsyncpa %s1782, 1
    %1784 = vsyncpa [#allocation5], 1
    %s1785 = scalar_lea.sflag [#allocation5], 1
    %1786 = vsyncpa %s1785, 1

</llo_original>
